<compile_context>
chip_gen: v7x
topology: tpu7x:2x2x1
jax: 0.10.0
libtpu: 0.0.40
codegen_flags: <defaults>
</compile_context>

<pallas_src>
import functools

import jax
import jax.numpy as jnp
from jax.experimental import pallas as pl
from jax.experimental.pallas import tpu as pltpu


def _round_up(x: int, m: int) -> int:
    return ((x + m - 1) // m) * m


def _tpu_vmem_capacity_bytes() -> int:
    """Physical VMEM per core; conservative fallback if the query fails."""
    try:
        return int(pltpu.get_tpu_info().vmem_capacity_bytes)
    except Exception:
        return 64 * 1024 * 1024  # v7x per-core VMEM (smallest of the three gens)


def _default_row_tile() -> int:
    # v5e/v6e: 128 MiB VMEM, single TensorCore -> a bigger tile amortizes the
    # per-step grid overhead.  v7x: 64 MiB VMEM, 2 TCs -> keep 512 so we still
    # get >= 2 tiles to split across the cores.
    return 1024 if _tpu_vmem_capacity_bytes() >= 100 * 1024 * 1024 else 512


def _make_fused_mlp_kernel(n_layers: int, coord_dim: int, layer0_vpu: bool):
    """Fused MLP kernel: refs = (x, w0, b0, ..., w{L-1}, b{L-1}, out)."""

    def kernel(*refs):
        x_ref = refs[0]
        o_ref = refs[-1]
        wb = refs[1:-1]

        w0 = wb[0][...]
        b0 = wb[1][...].astype(jnp.float32)

        if layer0_vpu:
            # Layer 0 on the VPU: h = x @ w0 + b0 with tiny K (coord_dim),
            # avoiding a 128-wide zero-padded MXU pass entirely.
            x = x_ref[...].astype(jnp.float32)            # (tm, coord_dim)
            h = x[:, 0:1] * w0[0:1, :] + b0               # (tm, H1p)
            for c in range(1, coord_dim):
                h = h + x[:, c:c + 1] * w0[c:c + 1, :]
        else:
            # Fallback for large coord_dim: lane-dense MXU matmul, bf16 operands.
            h = jnp.dot(x_ref[...].astype(jnp.bfloat16), w0,
                        preferred_element_type=jnp.float32) + b0

        h = jnp.tanh(h) if n_layers == 1 else jnp.maximum(h, 0.0)

        for l in range(1, n_layers):
            w = wb[2 * l][...]                            # bf16, VMEM-resident
            b = wb[2 * l + 1][...].astype(jnp.float32)
            # bf16 MXU inputs, f32 accumulation; bias add stays in f32.
            h = jnp.dot(h.astype(jnp.bfloat16), w,
                        preferred_element_type=jnp.float32) + b
            if l < n_layers - 1:
                h = jnp.maximum(h, 0.0)                   # ReLU (VPU)
            else:
                h = jnp.tanh(h)                           # final Tanh (EUP)

        o_ref[...] = h.astype(o_ref.dtype)

    return kernel


@functools.partial(jax.jit, static_argnames=("tm",))
def fourier_relu_forward(params, coords, *, tm: int | None = None):
    """Fused forward pass of the FourierReLU MLP.

    params: list of (w, b) with w: (d_in, d_out), b: (d_out,)
    coords: (N, coord_dim) float32
    returns: (N, num_c) float32
    """
    n, coord_dim = coords.shape
    n_layers = len(params)
    num_c = params[-1][0].shape[1]

    if tm is None:
        tm = _default_row_tile()

    # Feature dims (hidden + output) padded to lane-dense multiples of 128.
    dims = [coord_dim] + [int(w.shape[1]) for (w, _) in params]
    pdims = [_round_up(max(int(d), 1), 128) for d in dims]
    layer0_vpu = coord_dim <= 8            # tiny K -> do layer 0 on the VPU
    x_cols = coord_dim if layer0_vpu else pdims[0]

    # Balanced row tiling; force >= 2 tiles (when N > 8) so the "parallel"
    # grid axis can actually split across v7x's two TensorCores.
    num_tiles = max(pl.cdiv(n, tm), 2) if n > 8 else 1
    tm_eff = _round_up(pl.cdiv(n, num_tiles), 16)   # 16: bf16 sublane packing
    n_pad = tm_eff * num_tiles

    # Coords are NOT padded to 128 columns (only a few padding rows).
    x_p = jnp.pad(coords.astype(jnp.float32),
                  ((0, n_pad - n), (0, x_cols - coord_dim)))

    resident = pl.Buffered(1)   # grid-invariant operands: no double-buffering
    flat_wb = []
    in_specs = [pl.BlockSpec((tm_eff, x_cols), lambda i: (i, 0))]
    for l, (w, b) in enumerate(params):
        d_in, d_out = w.shape
        in_pad = coord_dim if (l == 0 and layer0_vpu) else pdims[l]
        wp = jnp.pad(w.astype(jnp.float32),
                     ((0, in_pad - d_in), (0, pdims[l + 1] - d_out)))
        if not (l == 0 and layer0_vpu):
            wp = wp.astype(jnp.bfloat16)           # MXU-native bf16 operands
        bp = jnp.pad(b.astype(jnp.float32), (0, pdims[l + 1] - d_out))
        bp = bp.reshape(1, pdims[l + 1])
        flat_wb.extend([wp, bp])
        # Full-array blocks, constant index_map: DMA'd once, resident in VMEM.
        in_specs.append(pl.BlockSpec(wp.shape, lambda i: (0, 0),
                                     pipeline_mode=resident))
        in_specs.append(pl.BlockSpec(bp.shape, lambda i: (0, 0),
                                     pipeline_mode=resident))

    out_pad = pdims[-1]
    out_dtype = jnp.bfloat16    # halve output writeback; upcast after slicing

    # VMEM budget: resident weights + double-buffered I/O tiles + activations,
    # +40% headroom, capped at ~80% of physical VMEM.
    w_bytes = sum(int(a.size) * a.dtype.itemsize for a in flat_wb)
    io_bytes = 2 * tm_eff * x_cols * 4 + 2 * tm_eff * out_pad * 2
    act_bytes = 4 * tm_eff * max(pdims[1:]) * 4
    need = w_bytes + io_bytes + act_bytes
    cap = int(0.8 * _tpu_vmem_capacity_bytes())
    vmem_limit = min(max(int(1.4 * need) + (2 << 20), 32 << 20), cap)

    out = pl.pallas_call(
        _make_fused_mlp_kernel(n_layers, coord_dim, layer0_vpu),
        out_shape=jax.ShapeDtypeStruct((n_pad, out_pad), out_dtype),
        grid=(num_tiles,),
        in_specs=in_specs,
        out_specs=pl.BlockSpec((tm_eff, out_pad), lambda i: (i, 0)),
        compiler_params=pltpu.CompilerParams(
            dimension_semantics=("parallel",),   # row tiles shard across TCs
            vmem_limit_bytes=vmem_limit,
        ),
    )(x_p, *flat_wb)

    return out[:n, :num_c].astype(jnp.float32)


def init_fourier_relu_params(key, coord_dim, num_c, hidden_node=256, depth=5):
    """Init matching torch.nn.Linear default: U(-1/sqrt(fan_in), 1/sqrt(fan_in))."""
    dims = [coord_dim] + [hidden_node] * (depth - 1) + [num_c]
    params = []
    for d_in, d_out in zip(dims[:-1], dims[1:]):
        key, kw, kb = jax.random.split(key, 3)
        bound = 1.0 / jnp.sqrt(float(d_in))
        w = jax.random.uniform(kw, (d_in, d_out), jnp.float32, -bound, bound)
        b = jax.random.uniform(kb, (d_out,), jnp.float32, -bound, bound)
        params.append((w, b))
    return params


if __name__ == "__main__":
    # Small deterministic example consistent with the module's forward:
    # coords in R^{N x coord_dim}, output in R^{N x num_c}.
    coord_dim = 2
    num_c = 3
    hidden_node = 32
    depth = 5
    N = 300  # deliberately NOT a multiple of the row tile

    key = jax.random.PRNGKey(0)
    k_params, k_coords = jax.random.split(key)

    params = init_fourier_relu_params(
        k_params, coord_dim, num_c, hidden_node=hidden_node, depth=depth
    )
    coords = jax.random.uniform(
        k_coords, (N, coord_dim), jnp.float32, minval=-1.0, maxval=1.0
    )

    out = jax.block_until_ready(fourier_relu_forward(params, coords))
    assert out.shape == (N, num_c)

    # Reference A: replicates the kernel's numerics exactly in plain JAX
    # (layer 0 in f32 broadcast-FMAs, bf16 MXU operands + f32 accumulation
    # afterwards, bf16 output store) -> tight tolerance.
    ref_m = coords
    for idx, (w, b) in enumerate(params):
        if idx == 0:
            acc = coords[:, 0:1] * w[0:1, :] + b
            for c in range(1, coord_dim):
                acc = acc + coords[:, c:c + 1] * w[c:c + 1, :]
            ref_m = acc
        else:
            ref_m = jnp.dot(ref_m.astype(jnp.bfloat16), w.astype(jnp.bfloat16),
                            preferred_element_type=jnp.float32) + b
        ref_m = jnp.tanh(ref_m) if idx == len(params) - 1 else jnp.maximum(ref_m, 0.0)
    ref_m = ref_m.astype(jnp.bfloat16).astype(jnp.float32)

    # Reference B: pure-f32 module semantics -> loose (bf16 rounding budget).
    ref_f = coords
    for idx, (w, b) in enumerate(params):
        ref_f = ref_f @ w + b
        ref_f = jnp.tanh(ref_f) if idx == len(params) - 1 else jnp.maximum(ref_f, 0.0)

    err_m = float(jnp.max(jnp.abs(out - ref_m)))
    err_f = float(jnp.max(jnp.abs(out - ref_f)))
    assert err_m < 1e-2, f"mismatch vs bf16-matched reference: {err_m}"
    assert err_f < 5e-2, f"mismatch vs f32 reference: {err_f}"

    print("KERNEL_OK")
</pallas_src>

<mosaic_0001>
module attributes {stable_mosaic.version = 11 : i64} {
  func.func @kernel(%arg0: i32, %arg1: memref<160x2xf32, #tpu.memory_space<vmem>>, %arg2: memref<2x128xf32, #tpu.memory_space<vmem>>, %arg3: memref<1x128xf32, #tpu.memory_space<vmem>>, %arg4: memref<128x128xbf16, #tpu.memory_space<vmem>>, %arg5: memref<1x128xf32, #tpu.memory_space<vmem>>, %arg6: memref<128x128xbf16, #tpu.memory_space<vmem>>, %arg7: memref<1x128xf32, #tpu.memory_space<vmem>>, %arg8: memref<128x128xbf16, #tpu.memory_space<vmem>>, %arg9: memref<1x128xf32, #tpu.memory_space<vmem>>, %arg10: memref<128x128xbf16, #tpu.memory_space<vmem>>, %arg11: memref<1x128xf32, #tpu.memory_space<vmem>>, %arg12: memref<160x128xbf16, #tpu.memory_space<vmem>>) attributes {dimension_semantics = [#tpu.dimension_semantics<parallel>], iteration_bounds = array<i64: 2>, scalar_prefetch = 0 : i64, scratch_operands = 0 : i64, tpu.core_type = #tpu.core_type<tc>, window_params = [{transform_indices = @transform_0, window_bounds = array<i64: 160, 2>}, {pipeline_mode = #tpu.pipeline_mode<synchronous>, transform_indices = @transform_1, window_bounds = array<i64: 2, 128>}, {pipeline_mode = #tpu.pipeline_mode<synchronous>, transform_indices = @transform_2, window_bounds = array<i64: 1, 128>}, {pipeline_mode = #tpu.pipeline_mode<synchronous>, transform_indices = @transform_3, window_bounds = array<i64: 128, 128>}, {pipeline_mode = #tpu.pipeline_mode<synchronous>, transform_indices = @transform_4, window_bounds = array<i64: 1, 128>}, {pipeline_mode = #tpu.pipeline_mode<synchronous>, transform_indices = @transform_5, window_bounds = array<i64: 128, 128>}, {pipeline_mode = #tpu.pipeline_mode<synchronous>, transform_indices = @transform_6, window_bounds = array<i64: 1, 128>}, {pipeline_mode = #tpu.pipeline_mode<synchronous>, transform_indices = @transform_7, window_bounds = array<i64: 128, 128>}, {pipeline_mode = #tpu.pipeline_mode<synchronous>, transform_indices = @transform_8, window_bounds = array<i64: 1, 128>}, {pipeline_mode = #tpu.pipeline_mode<synchronous>, transform_indices = @transform_9, window_bounds = array<i64: 128, 128>}, {pipeline_mode = #tpu.pipeline_mode<synchronous>, transform_indices = @transform_10, window_bounds = array<i64: 1, 128>}, {transform_indices = @transform_11, window_bounds = array<i64: 160, 128>}]} {
    %c0 = arith.constant 0 : index
    %c0_0 = arith.constant 0 : index
    %0 = vector.load %arg2[%c0, %c0_0] : memref<2x128xf32, #tpu.memory_space<vmem>>, vector<2x128xf32>
    %c0_1 = arith.constant 0 : index
    %c0_2 = arith.constant 0 : index
    %1 = vector.load %arg3[%c0_1, %c0_2] : memref<1x128xf32, #tpu.memory_space<vmem>>, vector<1x128xf32>
    %c0_3 = arith.constant 0 : index
    %c0_4 = arith.constant 0 : index
    %2 = vector.load %arg1[%c0_3, %c0_4] : memref<160x2xf32, #tpu.memory_space<vmem>>, vector<160x2xf32>
    %3 = vector.extract_strided_slice %2 {offsets = [0, 0], sizes = [160, 1], strides = [1, 1]} : vector<160x2xf32> to vector<160x1xf32>
    %4 = vector.extract_strided_slice %0 {offsets = [0, 0], sizes = [1, 128], strides = [1, 1]} : vector<2x128xf32> to vector<1x128xf32>
    %5 = vector.broadcast %3 : vector<160x1xf32> to vector<160x128xf32>
    %6 = vector.broadcast %4 : vector<1x128xf32> to vector<160x128xf32>
    %7 = arith.mulf %5, %6 : vector<160x128xf32>
    %8 = vector.broadcast %1 : vector<1x128xf32> to vector<160x128xf32>
    %9 = arith.addf %7, %8 : vector<160x128xf32>
    %10 = vector.extract_strided_slice %2 {offsets = [0, 1], sizes = [160, 1], strides = [1, 1]} : vector<160x2xf32> to vector<160x1xf32>
    %11 = vector.extract_strided_slice %0 {offsets = [1, 0], sizes = [1, 128], strides = [1, 1]} : vector<2x128xf32> to vector<1x128xf32>
    %12 = vector.broadcast %10 : vector<160x1xf32> to vector<160x128xf32>
    %13 = vector.broadcast %11 : vector<1x128xf32> to vector<160x128xf32>
    %14 = arith.mulf %12, %13 : vector<160x128xf32>
    %15 = arith.addf %9, %14 : vector<160x128xf32>
    %cst = arith.constant 0.000000e+00 : f32
    %16 = vector.broadcast %cst : f32 to vector<160x128xf32>
    %17 = arith.maximumf %15, %16 : vector<160x128xf32>
    %c0_5 = arith.constant 0 : index
    %c0_6 = arith.constant 0 : index
    %18 = vector.load %arg4[%c0_5, %c0_6] : memref<128x128xbf16, #tpu.memory_space<vmem>>, vector<128x128xbf16>
    %c0_7 = arith.constant 0 : index
    %c0_8 = arith.constant 0 : index
    %19 = vector.load %arg5[%c0_7, %c0_8] : memref<1x128xf32, #tpu.memory_space<vmem>>, vector<1x128xf32>
    %20 = arith.truncf %17 : vector<160x128xf32> to vector<160x128xbf16>
    %cst_9 = arith.constant dense<0.000000e+00> : vector<160x128xf32>
    %21 = tpu.matmul %20, %18, %cst_9 {dimension_numbers = #tpu.dot_dimension_numbers<[1], [0], [0], [1], [0, 0, 1, 1], [], []>} : vector<160x128xbf16>, vector<128x128xbf16>, vector<160x128xf32> -> vector<160x128xf32>
    %22 = vector.broadcast %19 : vector<1x128xf32> to vector<160x128xf32>
    %23 = arith.addf %21, %22 : vector<160x128xf32>
    %cst_10 = arith.constant 0.000000e+00 : f32
    %24 = vector.broadcast %cst_10 : f32 to vector<160x128xf32>
    %25 = arith.maximumf %23, %24 : vector<160x128xf32>
    %c0_11 = arith.constant 0 : index
    %c0_12 = arith.constant 0 : index
    %26 = vector.load %arg6[%c0_11, %c0_12] : memref<128x128xbf16, #tpu.memory_space<vmem>>, vector<128x128xbf16>
    %c0_13 = arith.constant 0 : index
    %c0_14 = arith.constant 0 : index
    %27 = vector.load %arg7[%c0_13, %c0_14] : memref<1x128xf32, #tpu.memory_space<vmem>>, vector<1x128xf32>
    %28 = arith.truncf %25 : vector<160x128xf32> to vector<160x128xbf16>
    %cst_15 = arith.constant dense<0.000000e+00> : vector<160x128xf32>
    %29 = tpu.matmul %28, %26, %cst_15 {dimension_numbers = #tpu.dot_dimension_numbers<[1], [0], [0], [1], [0, 0, 1, 1], [], []>} : vector<160x128xbf16>, vector<128x128xbf16>, vector<160x128xf32> -> vector<160x128xf32>
    %30 = vector.broadcast %27 : vector<1x128xf32> to vector<160x128xf32>
    %31 = arith.addf %29, %30 : vector<160x128xf32>
    %cst_16 = arith.constant 0.000000e+00 : f32
    %32 = vector.broadcast %cst_16 : f32 to vector<160x128xf32>
    %33 = arith.maximumf %31, %32 : vector<160x128xf32>
    %c0_17 = arith.constant 0 : index
    %c0_18 = arith.constant 0 : index
    %34 = vector.load %arg8[%c0_17, %c0_18] : memref<128x128xbf16, #tpu.memory_space<vmem>>, vector<128x128xbf16>
    %c0_19 = arith.constant 0 : index
    %c0_20 = arith.constant 0 : index
    %35 = vector.load %arg9[%c0_19, %c0_20] : memref<1x128xf32, #tpu.memory_space<vmem>>, vector<1x128xf32>
    %36 = arith.truncf %33 : vector<160x128xf32> to vector<160x128xbf16>
    %cst_21 = arith.constant dense<0.000000e+00> : vector<160x128xf32>
    %37 = tpu.matmul %36, %34, %cst_21 {dimension_numbers = #tpu.dot_dimension_numbers<[1], [0], [0], [1], [0, 0, 1, 1], [], []>} : vector<160x128xbf16>, vector<128x128xbf16>, vector<160x128xf32> -> vector<160x128xf32>
    %38 = vector.broadcast %35 : vector<1x128xf32> to vector<160x128xf32>
    %39 = arith.addf %37, %38 : vector<160x128xf32>
    %cst_22 = arith.constant 0.000000e+00 : f32
    %40 = vector.broadcast %cst_22 : f32 to vector<160x128xf32>
    %41 = arith.maximumf %39, %40 : vector<160x128xf32>
    %c0_23 = arith.constant 0 : index
    %c0_24 = arith.constant 0 : index
    %42 = vector.load %arg10[%c0_23, %c0_24] : memref<128x128xbf16, #tpu.memory_space<vmem>>, vector<128x128xbf16>
    %c0_25 = arith.constant 0 : index
    %c0_26 = arith.constant 0 : index
    %43 = vector.load %arg11[%c0_25, %c0_26] : memref<1x128xf32, #tpu.memory_space<vmem>>, vector<1x128xf32>
    %44 = arith.truncf %41 : vector<160x128xf32> to vector<160x128xbf16>
    %cst_27 = arith.constant dense<0.000000e+00> : vector<160x128xf32>
    %45 = tpu.matmul %44, %42, %cst_27 {dimension_numbers = #tpu.dot_dimension_numbers<[1], [0], [0], [1], [0, 0, 1, 1], [], []>} : vector<160x128xbf16>, vector<128x128xbf16>, vector<160x128xf32> -> vector<160x128xf32>
    %46 = vector.broadcast %43 : vector<1x128xf32> to vector<160x128xf32>
    %47 = arith.addf %45, %46 : vector<160x128xf32>
    %48 = math.tanh %47 : vector<160x128xf32>
    %49 = arith.truncf %48 : vector<160x128xf32> to vector<160x128xbf16>
    %c0_28 = arith.constant 0 : index
    %c0_29 = arith.constant 0 : index
    %50 = vector.load %arg12[%c0_28, %c0_29] : memref<160x128xbf16, #tpu.memory_space<vmem>>, vector<160x128xbf16>
    tpu.vector_store %arg12[%c0_28, %c0_29], %49 {strides = array<i32>} : memref<160x128xbf16, #tpu.memory_space<vmem>>, vector<160x128xbf16>,
    return
  }
  func.func @transform_0(%arg0: i32) -> (i32, i32) {
    %c0_i32 = arith.constant 0 : i32
    %c0_i32_0 = arith.constant 0 : i32
    return %arg0, %c0_i32 : i32, i32
  }
  func.func @transform_1(%arg0: i32) -> (i32, i32) {
    %c0_i32 = arith.constant 0 : i32
    %c0_i32_0 = arith.constant 0 : i32
    %c0_i32_1 = arith.constant 0 : i32
    return %c0_i32, %c0_i32_0 : i32, i32
  }
  func.func @transform_2(%arg0: i32) -> (i32, i32) {
    %c0_i32 = arith.constant 0 : i32
    %c0_i32_0 = arith.constant 0 : i32
    %c0_i32_1 = arith.constant 0 : i32
    return %c0_i32, %c0_i32_0 : i32, i32
  }
  func.func @transform_3(%arg0: i32) -> (i32, i32) {
    %c0_i32 = arith.constant 0 : i32
    %c0_i32_0 = arith.constant 0 : i32
    %c0_i32_1 = arith.constant 0 : i32
    return %c0_i32, %c0_i32_0 : i32, i32
  }
  func.func @transform_4(%arg0: i32) -> (i32, i32) {
    %c0_i32 = arith.constant 0 : i32
    %c0_i32_0 = arith.constant 0 : i32
    %c0_i32_1 = arith.constant 0 : i32
    return %c0_i32, %c0_i32_0 : i32, i32
  }
  func.func @transform_5(%arg0: i32) -> (i32, i32) {
    %c0_i32 = arith.constant 0 : i32
    %c0_i32_0 = arith.constant 0 : i32
    %c0_i32_1 = arith.constant 0 : i32
    return %c0_i32, %c0_i32_0 : i32, i32
  }
  func.func @transform_6(%arg0: i32) -> (i32, i32) {
    %c0_i32 = arith.constant 0 : i32
    %c0_i32_0 = arith.constant 0 : i32
    %c0_i32_1 = arith.constant 0 : i32
    return %c0_i32, %c0_i32_0 : i32, i32
  }
  func.func @transform_7(%arg0: i32) -> (i32, i32) {
    %c0_i32 = arith.constant 0 : i32
    %c0_i32_0 = arith.constant 0 : i32
    %c0_i32_1 = arith.constant 0 : i32
    return %c0_i32, %c0_i32_0 : i32, i32
  }
  func.func @transform_8(%arg0: i32) -> (i32, i32) {
    %c0_i32 = arith.constant 0 : i32
    %c0_i32_0 = arith.constant 0 : i32
    %c0_i32_1 = arith.constant 0 : i32
    return %c0_i32, %c0_i32_0 : i32, i32
  }
  func.func @transform_9(%arg0: i32) -> (i32, i32) {
    %c0_i32 = arith.constant 0 : i32
    %c0_i32_0 = arith.constant 0 : i32
    %c0_i32_1 = arith.constant 0 : i32
    return %c0_i32, %c0_i32_0 : i32, i32
  }
  func.func @transform_10(%arg0: i32) -> (i32, i32) {
    %c0_i32 = arith.constant 0 : i32
    %c0_i32_0 = arith.constant 0 : i32
    %c0_i32_1 = arith.constant 0 : i32
    return %c0_i32, %c0_i32_0 : i32, i32
  }
  func.func @transform_11(%arg0: i32) -> (i32, i32) {
    %c0_i32 = arith.constant 0 : i32
    %c0_i32_0 = arith.constant 0 : i32
    return %arg0, %c0_i32 : i32, i32
  }
}

</mosaic_0001>

<llo_original>
// kernel: fourier_relu_forward.1
$region0: #{fourier_relu_forward.1}
  #allocation0 [shape = 'u32[]', space=smem, size = 0x4, offset = 0x4, fixed_abs, tag = 'smem constant byte address 0x4 - core index']
  #allocation1 [shape = 'u32[144,128]{1,0:T(1,128)}', space=vmem, size = 0x12000, scoped, tag = 'internal scratch']
  %s0 = inlined_call_operand.vmem [shape: f32[320,2], index: 0, kind: input, shape index: {}]
  %s1 = inlined_call_operand.vmem [shape: f32[2,128], index: 1, kind: input, shape index: {}]
  %s2 = inlined_call_operand.vmem [shape: f32[1,128], index: 2, kind: input, shape index: {}]
  %s3 = inlined_call_operand.vmem [shape: bf16[128,128], index: 3, kind: input, shape index: {}]
  %s4 = inlined_call_operand.vmem [shape: f32[1,128], index: 4, kind: input, shape index: {}]
  %s5 = inlined_call_operand.vmem [shape: bf16[128,128], index: 5, kind: input, shape index: {}]
  %s6 = inlined_call_operand.vmem [shape: f32[1,128], index: 6, kind: input, shape index: {}]
  %s7 = inlined_call_operand.vmem [shape: bf16[128,128], index: 7, kind: input, shape index: {}]
  %s8 = inlined_call_operand.vmem [shape: f32[1,128], index: 8, kind: input, shape index: {}]
  %s9 = inlined_call_operand.vmem [shape: bf16[128,128], index: 9, kind: input, shape index: {}]
  %s10 = inlined_call_operand.vmem [shape: f32[1,128], index: 10, kind: input, shape index: {}]
  %s11 = inlined_call_operand.vmem [shape: bf16[320,128], index: 11, kind: output, shape index: {}]
  %s12 = sld [smem:[#allocation0]]
  $region77: #{fourier_relu_forward.1} parent=0
    _
  %s14 = ssub.s32 1, %s12
  %s15 = scalar_select 0, %s14, %s12
  loop: start=0, step=1, limit=4
  $region2: #{fourier_relu_forward.1} parent=0 // loop_pre_header
    _
  $region3: #{fourier_relu_forward.1} parent=0 // loop_header
    %s17 = sphi 0, %s21
    %p18 = scmp.ge.s32.totalorder %s17, 4
    %s27 = sphi 0, %s29
    %s30 = sphi 0, %s27
    %s31 = sphi 0, %s30
    %s47 = sphi 0, %s31
    %s51 = sphi 0, %s51
    %s53 = sphi 0, %s51
    %s54 = sphi 0, %s53
    %s68 = sphi 0, %s54
    %s72 = sphi 0, %s72
    %s74 = sphi 0, %s72
    %s75 = sphi 0, %s74
    %s89 = sphi 0, %s75
    %s93 = sphi 0, %s93
    %s95 = sphi 0, %s93
    %s96 = sphi 0, %s95
    %s110 = sphi 0, %s96
    %s114 = sphi 0, %s114
    %s116 = sphi 0, %s114
    %s117 = sphi 0, %s116
    %s131 = sphi 0, %s117
    %s135 = sphi 0, %s135
    %s137 = sphi 0, %s135
    %s138 = sphi 0, %s137
    %s152 = sphi 0, %s138
    %s156 = sphi 0, %s156
    %s158 = sphi 0, %s156
    %s159 = sphi 0, %s158
    %s173 = sphi 0, %s159
    %s177 = sphi 0, %s177
    %s179 = sphi 0, %s177
    %s180 = sphi 0, %s179
    %s194 = sphi 0, %s180
    %s198 = sphi 0, %s198
    %s200 = sphi 0, %s198
    %s201 = sphi 0, %s200
    %s215 = sphi 0, %s201
    %s219 = sphi 0, %s219
    %s221 = sphi 0, %s219
    %s222 = sphi 0, %s221
    %s236 = sphi 0, %s222
    %s240 = sphi 0, %s240
    %s242 = sphi 0, %s240
    %s243 = sphi 0, %s242
    %s257 = sphi 0, %s243
    %s263 = sphi 0, %s265
    %s266 = sphi 0, %s263
    %s267 = sphi 0, %s266
    %s283 = sphi 0, %s267
  $region4: #{fourier_relu_forward.1} parent=0 // loop_header_branch
    %20 = sbr.rel (%p18) target = $region8
  $region5: #{fourier_relu_forward.1} parent=0 // loop_body
    %s22 = ssub.s32 %s17, 1
    %s23 = ssub.s32 %s17, 2
    %s24 = sadd.s32 %s17, 1
    %s25 = ssub.s32 %s17, %s24
    %p26 = scmp.eq.s32.totalorder %s25, 0
    %s28 = sadd.s32 %s27, 1
    %s29 = scalar_select %p26, %s27, %s28
    %p32 = pneg %p26
    %p33 = scmp.eq.s32.totalorder %s17, 1
    %p34 = por %p32, %p33
    %p35 = scmp.ne.s32.totalorder %s27, %s30
    %p36 = scmp.eq.s32.totalorder %s17, 0
    %p37 = por %p35, %p36
    %p38 = scmp.ne.s32.totalorder %s27, %s30
    %p39 = scmp.eq.s32.totalorder %s22, 1
    %p40 = por %p38, %p39
    %p41 = scmp.ne.s32.totalorder %s30, %s31
    %p42 = scmp.eq.s32.totalorder %s22, 0
    %p43 = por %p41, %p42
    %p44 = scmp.ne.s32.totalorder %s30, %s31
    %p45 = scmp.eq.s32.totalorder %s23, 1
    %p46 = por %p44, %p45
    %p48 = scmp.ne.s32.totalorder %s31, %s47
    %p49 = scmp.eq.s32.totalorder %s23, 0
    %p50 = por %p48, %p49
    %s52 = sadd.s32 %s51, 1
    %p55 = scmp.eq.s32.totalorder %s17, 1
    %p56 = scmp.ne.s32.totalorder %s51, %s53
    %p57 = scmp.eq.s32.totalorder %s17, 0
    %p58 = por %p56, %p57
    %p59 = scmp.ne.s32.totalorder %s51, %s53
    %p60 = scmp.eq.s32.totalorder %s22, 1
    %p61 = por %p59, %p60
    %p62 = scmp.ne.s32.totalorder %s53, %s54
    %p63 = scmp.eq.s32.totalorder %s22, 0
    %p64 = por %p62, %p63
    %p65 = scmp.ne.s32.totalorder %s53, %s54
    %p66 = scmp.eq.s32.totalorder %s23, 1
    %p67 = por %p65, %p66
    %p69 = scmp.ne.s32.totalorder %s54, %s68
    %p70 = scmp.eq.s32.totalorder %s23, 0
    %p71 = por %p69, %p70
    %s73 = sadd.s32 %s72, 1
    %p76 = scmp.eq.s32.totalorder %s17, 1
    %p77 = scmp.ne.s32.totalorder %s72, %s74
    %p78 = scmp.eq.s32.totalorder %s17, 0
    %p79 = por %p77, %p78
    %p80 = scmp.ne.s32.totalorder %s72, %s74
    %p81 = scmp.eq.s32.totalorder %s22, 1
    %p82 = por %p80, %p81
    %p83 = scmp.ne.s32.totalorder %s74, %s75
    %p84 = scmp.eq.s32.totalorder %s22, 0
    %p85 = por %p83, %p84
    %p86 = scmp.ne.s32.totalorder %s74, %s75
    %p87 = scmp.eq.s32.totalorder %s23, 1
    %p88 = por %p86, %p87
    %p90 = scmp.ne.s32.totalorder %s75, %s89
    %p91 = scmp.eq.s32.totalorder %s23, 0
    %p92 = por %p90, %p91
    %s94 = sadd.s32 %s93, 1
    %p97 = scmp.eq.s32.totalorder %s17, 1
    %p98 = scmp.ne.s32.totalorder %s93, %s95
    %p99 = scmp.eq.s32.totalorder %s17, 0
    %p100 = por %p98, %p99
    %p101 = scmp.ne.s32.totalorder %s93, %s95
    %p102 = scmp.eq.s32.totalorder %s22, 1
    %p103 = por %p101, %p102
    %p104 = scmp.ne.s32.totalorder %s95, %s96
    %p105 = scmp.eq.s32.totalorder %s22, 0
    %p106 = por %p104, %p105
    %p107 = scmp.ne.s32.totalorder %s95, %s96
    %p108 = scmp.eq.s32.totalorder %s23, 1
    %p109 = por %p107, %p108
    %p111 = scmp.ne.s32.totalorder %s96, %s110
    %p112 = scmp.eq.s32.totalorder %s23, 0
    %p113 = por %p111, %p112
    %s115 = sadd.s32 %s114, 1
    %p118 = scmp.eq.s32.totalorder %s17, 1
    %p119 = scmp.ne.s32.totalorder %s114, %s116
    %p120 = scmp.eq.s32.totalorder %s17, 0
    %p121 = por %p119, %p120
    %p122 = scmp.ne.s32.totalorder %s114, %s116
    %p123 = scmp.eq.s32.totalorder %s22, 1
    %p124 = por %p122, %p123
    %p125 = scmp.ne.s32.totalorder %s116, %s117
    %p126 = scmp.eq.s32.totalorder %s22, 0
    %p127 = por %p125, %p126
    %p128 = scmp.ne.s32.totalorder %s116, %s117
    %p129 = scmp.eq.s32.totalorder %s23, 1
    %p130 = por %p128, %p129
    %p132 = scmp.ne.s32.totalorder %s117, %s131
    %p133 = scmp.eq.s32.totalorder %s23, 0
    %p134 = por %p132, %p133
    %s136 = sadd.s32 %s135, 1
    %p139 = scmp.eq.s32.totalorder %s17, 1
    %p140 = scmp.ne.s32.totalorder %s135, %s137
    %p141 = scmp.eq.s32.totalorder %s17, 0
    %p142 = por %p140, %p141
    %p143 = scmp.ne.s32.totalorder %s135, %s137
    %p144 = scmp.eq.s32.totalorder %s22, 1
    %p145 = por %p143, %p144
    %p146 = scmp.ne.s32.totalorder %s137, %s138
    %p147 = scmp.eq.s32.totalorder %s22, 0
    %p148 = por %p146, %p147
    %p149 = scmp.ne.s32.totalorder %s137, %s138
    %p150 = scmp.eq.s32.totalorder %s23, 1
    %p151 = por %p149, %p150
    %p153 = scmp.ne.s32.totalorder %s138, %s152
    %p154 = scmp.eq.s32.totalorder %s23, 0
    %p155 = por %p153, %p154
    %s157 = sadd.s32 %s156, 1
    %p160 = scmp.eq.s32.totalorder %s17, 1
    %p161 = scmp.ne.s32.totalorder %s156, %s158
    %p162 = scmp.eq.s32.totalorder %s17, 0
    %p163 = por %p161, %p162
    %p164 = scmp.ne.s32.totalorder %s156, %s158
    %p165 = scmp.eq.s32.totalorder %s22, 1
    %p166 = por %p164, %p165
    %p167 = scmp.ne.s32.totalorder %s158, %s159
    %p168 = scmp.eq.s32.totalorder %s22, 0
    %p169 = por %p167, %p168
    %p170 = scmp.ne.s32.totalorder %s158, %s159
    %p171 = scmp.eq.s32.totalorder %s23, 1
    %p172 = por %p170, %p171
    %p174 = scmp.ne.s32.totalorder %s159, %s173
    %p175 = scmp.eq.s32.totalorder %s23, 0
    %p176 = por %p174, %p175
    %s178 = sadd.s32 %s177, 1
    %p181 = scmp.eq.s32.totalorder %s17, 1
    %p182 = scmp.ne.s32.totalorder %s177, %s179
    %p183 = scmp.eq.s32.totalorder %s17, 0
    %p184 = por %p182, %p183
    %p185 = scmp.ne.s32.totalorder %s177, %s179
    %p186 = scmp.eq.s32.totalorder %s22, 1
    %p187 = por %p185, %p186
    %p188 = scmp.ne.s32.totalorder %s179, %s180
    %p189 = scmp.eq.s32.totalorder %s22, 0
    %p190 = por %p188, %p189
    %p191 = scmp.ne.s32.totalorder %s179, %s180
    %p192 = scmp.eq.s32.totalorder %s23, 1
    %p193 = por %p191, %p192
    %p195 = scmp.ne.s32.totalorder %s180, %s194
    %p196 = scmp.eq.s32.totalorder %s23, 0
    %p197 = por %p195, %p196
    %s199 = sadd.s32 %s198, 1
    %p202 = scmp.eq.s32.totalorder %s17, 1
    %p203 = scmp.ne.s32.totalorder %s198, %s200
    %p204 = scmp.eq.s32.totalorder %s17, 0
    %p205 = por %p203, %p204
    %p206 = scmp.ne.s32.totalorder %s198, %s200
    %p207 = scmp.eq.s32.totalorder %s22, 1
    %p208 = por %p206, %p207
    %p209 = scmp.ne.s32.totalorder %s200, %s201
    %p210 = scmp.eq.s32.totalorder %s22, 0
    %p211 = por %p209, %p210
    %p212 = scmp.ne.s32.totalorder %s200, %s201
    %p213 = scmp.eq.s32.totalorder %s23, 1
    %p214 = por %p212, %p213
    %p216 = scmp.ne.s32.totalorder %s201, %s215
    %p217 = scmp.eq.s32.totalorder %s23, 0
    %p218 = por %p216, %p217
    %s220 = sadd.s32 %s219, 1
    %p223 = scmp.eq.s32.totalorder %s17, 1
    %p224 = scmp.ne.s32.totalorder %s219, %s221
    %p225 = scmp.eq.s32.totalorder %s17, 0
    %p226 = por %p224, %p225
    %p227 = scmp.ne.s32.totalorder %s219, %s221
    %p228 = scmp.eq.s32.totalorder %s22, 1
    %p229 = por %p227, %p228
    %p230 = scmp.ne.s32.totalorder %s221, %s222
    %p231 = scmp.eq.s32.totalorder %s22, 0
    %p232 = por %p230, %p231
    %p233 = scmp.ne.s32.totalorder %s221, %s222
    %p234 = scmp.eq.s32.totalorder %s23, 1
    %p235 = por %p233, %p234
    %p237 = scmp.ne.s32.totalorder %s222, %s236
    %p238 = scmp.eq.s32.totalorder %s23, 0
    %p239 = por %p237, %p238
    %s241 = sadd.s32 %s240, 1
    %p244 = scmp.eq.s32.totalorder %s17, 1
    %p245 = scmp.ne.s32.totalorder %s240, %s242
    %p246 = scmp.eq.s32.totalorder %s17, 0
    %p247 = por %p245, %p246
    %p248 = scmp.ne.s32.totalorder %s240, %s242
    %p249 = scmp.eq.s32.totalorder %s22, 1
    %p250 = por %p248, %p249
    %p251 = scmp.ne.s32.totalorder %s242, %s243
    %p252 = scmp.eq.s32.totalorder %s22, 0
    %p253 = por %p251, %p252
    %p254 = scmp.ne.s32.totalorder %s242, %s243
    %p255 = scmp.eq.s32.totalorder %s23, 1
    %p256 = por %p254, %p255
    %p258 = scmp.ne.s32.totalorder %s243, %s257
    %p259 = scmp.eq.s32.totalorder %s23, 0
    %p260 = por %p258, %p259
    %s261 = ssub.s32 %s17, %s24
    %p262 = scmp.eq.s32.totalorder %s261, 0
    %s264 = sadd.s32 %s263, 1
    %s265 = scalar_select %p262, %s263, %s264
    %p268 = pneg %p262
    %p269 = scmp.eq.s32.totalorder %s17, 1
    %p270 = por %p268, %p269
    %p271 = scmp.ne.s32.totalorder %s263, %s266
    %p272 = scmp.eq.s32.totalorder %s17, 0
    %p273 = por %p271, %p272
    %p274 = scmp.ne.s32.totalorder %s263, %s266
    %p275 = scmp.eq.s32.totalorder %s22, 1
    %p276 = por %p274, %p275
    %p277 = scmp.ne.s32.totalorder %s266, %s267
    %p278 = scmp.eq.s32.totalorder %s22, 0
    %p279 = por %p277, %p278
    %p280 = scmp.ne.s32.totalorder %s266, %s267
    %p281 = scmp.eq.s32.totalorder %s23, 1
    %p282 = por %p280, %p281
    %p284 = scmp.ne.s32.totalorder %s267, %s283
    %p285 = scmp.eq.s32.totalorder %s23, 0
    %p286 = por %p284, %p285
    %p287 = scmp.le.s32.totalorder 1, %s17
    %p288 = scmp.lt.s32.totalorder %s17, 3
    %p289 = pnand %p287, %p288
    %p290 = pneg %p289
    // Predicated region
    $region9: #{fourier_relu_forward.1} parent=5 // pred_check
      _
    $region10: #{fourier_relu_forward.1} parent=5 // pred_check_branch
      %292 = sbr.rel (%p289) target = $region12
    $region11: #{fourier_relu_forward.1} parent=5 // pred_region
      %s293 = ssub.s32 %s17, 1
      // Predicated region
      $region13: #{fourier_relu_forward.1} parent=11 // pred_check
        %p294 = pneg %p64
      $region14: #{fourier_relu_forward.1} parent=11 // pred_check_branch
        %296 = sbr.rel (%p294) target = $region16
      $region15: #{fourier_relu_forward.1} parent=11 // pred_region
        _
      $region16: #{fourier_relu_forward.1} parent=11 // pred_fallthru
        _
      // Predicated region
      $region17: #{fourier_relu_forward.1} parent=11 // pred_check
        %p297 = pneg %p85
      $region18: #{fourier_relu_forward.1} parent=11 // pred_check_branch
        %299 = sbr.rel (%p297) target = $region20
      $region19: #{fourier_relu_forward.1} parent=11 // pred_region
        _
      $region20: #{fourier_relu_forward.1} parent=11 // pred_fallthru
        _
      // Predicated region
      $region21: #{fourier_relu_forward.1} parent=11 // pred_check
        %p300 = pneg %p106
      $region22: #{fourier_relu_forward.1} parent=11 // pred_check_branch
        %302 = sbr.rel (%p300) target = $region24
      $region23: #{fourier_relu_forward.1} parent=11 // pred_region
        _
      $region24: #{fourier_relu_forward.1} parent=11 // pred_fallthru
        _
      // Predicated region
      $region25: #{fourier_relu_forward.1} parent=11 // pred_check
        %p303 = pneg %p127
      $region26: #{fourier_relu_forward.1} parent=11 // pred_check_branch
        %305 = sbr.rel (%p303) target = $region28
      $region27: #{fourier_relu_forward.1} parent=11 // pred_region
        _
      $region28: #{fourier_relu_forward.1} parent=11 // pred_fallthru
        _
      // Predicated region
      $region29: #{fourier_relu_forward.1} parent=11 // pred_check
        %p306 = pneg %p148
      $region30: #{fourier_relu_forward.1} parent=11 // pred_check_branch
        %308 = sbr.rel (%p306) target = $region32
      $region31: #{fourier_relu_forward.1} parent=11 // pred_region
        _
      $region32: #{fourier_relu_forward.1} parent=11 // pred_fallthru
        _
      // Predicated region
      $region33: #{fourier_relu_forward.1} parent=11 // pred_check
        %p309 = pneg %p169
      $region34: #{fourier_relu_forward.1} parent=11 // pred_check_branch
        %311 = sbr.rel (%p309) target = $region36
      $region35: #{fourier_relu_forward.1} parent=11 // pred_region
        _
      $region36: #{fourier_relu_forward.1} parent=11 // pred_fallthru
        _
      // Predicated region
      $region37: #{fourier_relu_forward.1} parent=11 // pred_check
        %p312 = pneg %p190
      $region38: #{fourier_relu_forward.1} parent=11 // pred_check_branch
        %314 = sbr.rel (%p312) target = $region40
      $region39: #{fourier_relu_forward.1} parent=11 // pred_region
        _
      $region40: #{fourier_relu_forward.1} parent=11 // pred_fallthru
        _
      // Predicated region
      $region41: #{fourier_relu_forward.1} parent=11 // pred_check
        %p315 = pneg %p211
      $region42: #{fourier_relu_forward.1} parent=11 // pred_check_branch
        %317 = sbr.rel (%p315) target = $region44
      $region43: #{fourier_relu_forward.1} parent=11 // pred_region
        _
      $region44: #{fourier_relu_forward.1} parent=11 // pred_fallthru
        _
      // Predicated region
      $region45: #{fourier_relu_forward.1} parent=11 // pred_check
        %p318 = pneg %p232
      $region46: #{fourier_relu_forward.1} parent=11 // pred_check_branch
        %320 = sbr.rel (%p318) target = $region48
      $region47: #{fourier_relu_forward.1} parent=11 // pred_region
        _
      $region48: #{fourier_relu_forward.1} parent=11 // pred_fallthru
        _
      // Predicated region
      $region49: #{fourier_relu_forward.1} parent=11 // pred_check
        %p321 = pneg %p253
      $region50: #{fourier_relu_forward.1} parent=11 // pred_check_branch
        %323 = sbr.rel (%p321) target = $region52
      $region51: #{fourier_relu_forward.1} parent=11 // pred_region
        _
      $region52: #{fourier_relu_forward.1} parent=11 // pred_fallthru
        _
    $region12: #{fourier_relu_forward.1} parent=5 // pred_fallthru
      _
    %p324 = scmp.lt.s32.totalorder %s17, 2
    // Predicated region
    $region53: #{fourier_relu_forward.1} parent=5 // pred_check
      %p325 = pneg %p324
    $region54: #{fourier_relu_forward.1} parent=5 // pred_check_branch
      %327 = sbr.rel (%p325) target = $region56
    $region55: #{fourier_relu_forward.1} parent=5 // pred_region
      // Predicated region
      $region57: #{fourier_relu_forward.1} parent=55 // pred_check
        %p328 = pneg %p37
      $region58: #{fourier_relu_forward.1} parent=55 // pred_check_branch
        %330 = sbr.rel (%p328) target = $region60
      $region59: #{fourier_relu_forward.1} parent=55 // pred_region
        %s331 = smul.u32 20, %s17
        %p332 = scmp.lt.s32.totalorder %s331, 39
        %s333 = scalar_select %p332, %s331, 39
        %s334 = smul.addr %s333, 8
        %s335 = scalar_lea.vmem %s0, %s334
        %s336 = smul.u32 20, %s17
      $region60: #{fourier_relu_forward.1} parent=55 // pred_fallthru
        _
    $region56: #{fourier_relu_forward.1} parent=5 // pred_fallthru
      _
    %p337 = scmp.le.s32.totalorder 1, %s17
    %p338 = scmp.lt.s32.totalorder %s17, 3
    %p339 = pnand %p337, %p338
    %p340 = pneg %p339
    // Predicated region
    $region61: #{fourier_relu_forward.1} parent=5 // pred_check
      _
    $region62: #{fourier_relu_forward.1} parent=5 // pred_check_branch
      %342 = sbr.rel (%p339) target = $region64
    $region63: #{fourier_relu_forward.1} parent=5 // pred_region
      %s343 = ssub.s32 %s17, 1
      %s344 = smul.u32 20, %s22
      %p345 = scmp.lt.s32.totalorder %s344, 39
      %s346 = scalar_select %p345, %s344, 39
      %s347 = smul.addr %s346, 8
      %s348 = scalar_lea.vmem %s0, %s347
      %p349 = pneg %p43
      %p350 = pneg %p40
      %p351 = pneg %p64
      %p352 = pneg %p61
      %p353 = pneg %p85
      %p354 = pneg %p82
      %p355 = pneg %p106
      %p356 = pneg %p103
      %p357 = pneg %p127
      %p358 = pneg %p124
      %p359 = pneg %p148
      %p360 = pneg %p145
      %p361 = pneg %p169
      %p362 = pneg %p166
      %p363 = pneg %p190
      %p364 = pneg %p187
      %p365 = pneg %p211
      %p366 = pneg %p208
      %p367 = pneg %p232
      %p368 = pneg %p229
      %p369 = pneg %p253
      %p370 = pneg %p250
      %p371 = pneg %p279
      %p372 = pneg %p276
      %s373 = smul.u32 20, %s22
      %p374 = scmp.lt.s32.totalorder %s373, 39
      %s375 = scalar_select %p374, %s373, 39
      %s376 = smul.addr %s375, 4
      %s377 = scalar_lea.vmem %s11, %s376
      %s378 = smul.u32 20, %s22
      %p379 = scmp.lt.s32.totalorder %s378, 39
      %s380 = scalar_select %p379, %s378, 39
      %s381 = smul.addr %s380, 8
      %s382 = scalar_lea.vmem %s0, %s381
      %s383 = smul.u32 20, %s22
      %s384 = smul.u32 20, %s22
      %p385 = scmp.lt.s32.totalorder %s384, 39
      %s386 = scalar_select %p385, %s384, 39
      %s387 = smul.addr %s386, 4
      %s388 = scalar_lea.vmem %s11, %s387
      %s389 = smul.u32 20, %s22
      %v391 = vld [vmem:[%s1] sm:$0x3]
      %v392 = vld [vmem:[%s2] sm:$0x1]
      %v393 = vld [vmem:[%s382] sm:$0xff]
      %v394 = vld [vmem:[%s382 + $0x8] sm:$0xff]
      %v395 = vld [vmem:[%s382 + $0x10] sm:$0xff]
      %v396 = vld [vmem:[%s382 + $0x18] sm:$0xff]
      %v397 = vld [vmem:[%s382 + $0x20] sm:$0xff]
      %v398 = vld [vmem:[%s382 + $0x28] sm:$0xff]
      %v399 = vld [vmem:[%s382 + $0x30] sm:$0xff]
      %v400 = vld [vmem:[%s382 + $0x38] sm:$0xff]
      %v401 = vld [vmem:[%s382 + $0x40] sm:$0xff]
      %v402 = vld [vmem:[%s382 + $0x48] sm:$0xff]
      %v403 = vld [vmem:[%s382 + $0x50] sm:$0xff]
      %v404 = vld [vmem:[%s382 + $0x58] sm:$0xff]
      %v405 = vld [vmem:[%s382 + $0x60] sm:$0xff]
      %v406 = vld [vmem:[%s382 + $0x68] sm:$0xff]
      %v407 = vld [vmem:[%s382 + $0x70] sm:$0xff]
      %v408 = vld [vmem:[%s382 + $0x78] sm:$0xff]
      %v409 = vld [vmem:[%s382 + $0x80] sm:$0xff]
      %v410 = vld [vmem:[%s382 + $0x88] sm:$0xff]
      %v411 = vld [vmem:[%s382 + $0x90] sm:$0xff]
      %v412 = vld [vmem:[%s382 + $0x98] sm:$0xff]
      %414 = vset.pattern.permute.xlu0 0
      %415 = vperm.xlu0 %414, %v393
      %v416 = vpop.permute.xlu0 %415
      %419 = vset.pattern.permute.xlu0 0
      %420 = vperm.xlu0 %419, %v394
      %v421 = vpop.permute.xlu0 %420
      %424 = vset.pattern.permute.xlu0 0
      %425 = vperm.xlu0 %424, %v395
      %v426 = vpop.permute.xlu0 %425
      %429 = vset.pattern.permute.xlu0 0
      %430 = vperm.xlu0 %429, %v396
      %v431 = vpop.permute.xlu0 %430
      %434 = vset.pattern.permute.xlu0 0
      %435 = vperm.xlu0 %434, %v397
      %v436 = vpop.permute.xlu0 %435
      %439 = vset.pattern.permute.xlu0 0
      %440 = vperm.xlu0 %439, %v398
      %v441 = vpop.permute.xlu0 %440
      %444 = vset.pattern.permute.xlu0 0
      %445 = vperm.xlu0 %444, %v399
      %v446 = vpop.permute.xlu0 %445
      %449 = vset.pattern.permute.xlu0 0
      %450 = vperm.xlu0 %449, %v400
      %v451 = vpop.permute.xlu0 %450
      %454 = vset.pattern.permute.xlu0 0
      %455 = vperm.xlu0 %454, %v401
      %v456 = vpop.permute.xlu0 %455
      %459 = vset.pattern.permute.xlu0 0
      %460 = vperm.xlu0 %459, %v402
      %v461 = vpop.permute.xlu0 %460
      %464 = vset.pattern.permute.xlu0 0
      %465 = vperm.xlu0 %464, %v403
      %v466 = vpop.permute.xlu0 %465
      %469 = vset.pattern.permute.xlu0 0
      %470 = vperm.xlu0 %469, %v404
      %v471 = vpop.permute.xlu0 %470
      %474 = vset.pattern.permute.xlu0 0
      %475 = vperm.xlu0 %474, %v405
      %v476 = vpop.permute.xlu0 %475
      %479 = vset.pattern.permute.xlu0 0
      %480 = vperm.xlu0 %479, %v406
      %v481 = vpop.permute.xlu0 %480
      %484 = vset.pattern.permute.xlu0 0
      %485 = vperm.xlu0 %484, %v407
      %v486 = vpop.permute.xlu0 %485
      %489 = vset.pattern.permute.xlu0 0
      %490 = vperm.xlu0 %489, %v408
      %v491 = vpop.permute.xlu0 %490
      %494 = vset.pattern.permute.xlu0 0
      %495 = vperm.xlu0 %494, %v409
      %v496 = vpop.permute.xlu0 %495
      %499 = vset.pattern.permute.xlu0 0
      %500 = vperm.xlu0 %499, %v410
      %v501 = vpop.permute.xlu0 %500
      %504 = vset.pattern.permute.xlu0 0
      %505 = vperm.xlu0 %504, %v411
      %v506 = vpop.permute.xlu0 %505
      %509 = vset.pattern.permute.xlu0 0
      %510 = vperm.xlu0 %509, %v412
      %v511 = vpop.permute.xlu0 %510
      %v513 = vlaneseq
      %v514 = vshrl.u32 %v513, 7
      %v515 = vsub.s32 0, %v514
      %v516 = vrot.slane %v391, %v515
      %v517 = vmul.f32 %v416, %v516
      %v518 = vmul.f32 %v421, %v516
      %v519 = vmul.f32 %v426, %v516
      %v520 = vmul.f32 %v431, %v516
      %v521 = vmul.f32 %v436, %v516
      %v522 = vmul.f32 %v441, %v516
      %v523 = vmul.f32 %v446, %v516
      %v524 = vmul.f32 %v451, %v516
      %v525 = vmul.f32 %v456, %v516
      %v526 = vmul.f32 %v461, %v516
      %v527 = vmul.f32 %v466, %v516
      %v528 = vmul.f32 %v471, %v516
      %v529 = vmul.f32 %v476, %v516
      %v530 = vmul.f32 %v481, %v516
      %v531 = vmul.f32 %v486, %v516
      %v532 = vmul.f32 %v491, %v516
      %v533 = vmul.f32 %v496, %v516
      %v534 = vmul.f32 %v501, %v516
      %v535 = vmul.f32 %v506, %v516
      %v536 = vmul.f32 %v511, %v516
      %v538 = vlaneseq
      %v539 = vshrl.u32 %v538, 7
      %v540 = vsub.s32 0, %v539
      %v541 = vrot.slane %v392, %v540
      %v543 = vadd.f32 %v517, %v541
      %v544 = vadd.f32 %v518, %v541
      %v545 = vadd.f32 %v519, %v541
      %v546 = vadd.f32 %v520, %v541
      %v547 = vadd.f32 %v521, %v541
      %v548 = vadd.f32 %v522, %v541
      %v549 = vadd.f32 %v523, %v541
      %v550 = vadd.f32 %v524, %v541
      %v551 = vadd.f32 %v525, %v541
      %v552 = vadd.f32 %v526, %v541
      %v553 = vadd.f32 %v527, %v541
      %v554 = vadd.f32 %v528, %v541
      %v555 = vadd.f32 %v529, %v541
      %v556 = vadd.f32 %v530, %v541
      %v557 = vadd.f32 %v531, %v541
      %v558 = vadd.f32 %v532, %v541
      %v559 = vadd.f32 %v533, %v541
      %v560 = vadd.f32 %v534, %v541
      %v561 = vadd.f32 %v535, %v541
      %v562 = vadd.f32 %v536, %v541
      %563 = vset.pattern.permute.xlu0 1
      %564 = vperm.xlu0 %563, %v393
      %v565 = vpop.permute.xlu0 %564
      %567 = vset.pattern.permute.xlu0 1
      %568 = vperm.xlu0 %567, %v394
      %v569 = vpop.permute.xlu0 %568
      %571 = vset.pattern.permute.xlu0 1
      %572 = vperm.xlu0 %571, %v395
      %v573 = vpop.permute.xlu0 %572
      %575 = vset.pattern.permute.xlu0 1
      %576 = vperm.xlu0 %575, %v396
      %v577 = vpop.permute.xlu0 %576
      %579 = vset.pattern.permute.xlu0 1
      %580 = vperm.xlu0 %579, %v397
      %v581 = vpop.permute.xlu0 %580
      %583 = vset.pattern.permute.xlu0 1
      %584 = vperm.xlu0 %583, %v398
      %v585 = vpop.permute.xlu0 %584
      %587 = vset.pattern.permute.xlu0 1
      %588 = vperm.xlu0 %587, %v399
      %v589 = vpop.permute.xlu0 %588
      %591 = vset.pattern.permute.xlu0 1
      %592 = vperm.xlu0 %591, %v400
      %v593 = vpop.permute.xlu0 %592
      %595 = vset.pattern.permute.xlu0 1
      %596 = vperm.xlu0 %595, %v401
      %v597 = vpop.permute.xlu0 %596
      %599 = vset.pattern.permute.xlu0 1
      %600 = vperm.xlu0 %599, %v402
      %v601 = vpop.permute.xlu0 %600
      %603 = vset.pattern.permute.xlu0 1
      %604 = vperm.xlu0 %603, %v403
      %v605 = vpop.permute.xlu0 %604
      %607 = vset.pattern.permute.xlu0 1
      %608 = vperm.xlu0 %607, %v404
      %v609 = vpop.permute.xlu0 %608
      %611 = vset.pattern.permute.xlu0 1
      %612 = vperm.xlu0 %611, %v405
      %v613 = vpop.permute.xlu0 %612
      %615 = vset.pattern.permute.xlu0 1
      %616 = vperm.xlu0 %615, %v406
      %v617 = vpop.permute.xlu0 %616
      %619 = vset.pattern.permute.xlu0 1
      %620 = vperm.xlu0 %619, %v407
      %v621 = vpop.permute.xlu0 %620
      %623 = vset.pattern.permute.xlu0 1
      %624 = vperm.xlu0 %623, %v408
      %v625 = vpop.permute.xlu0 %624
      %627 = vset.pattern.permute.xlu0 1
      %628 = vperm.xlu0 %627, %v409
      %v629 = vpop.permute.xlu0 %628
      %631 = vset.pattern.permute.xlu0 1
      %632 = vperm.xlu0 %631, %v410
      %v633 = vpop.permute.xlu0 %632
      %635 = vset.pattern.permute.xlu0 1
      %636 = vperm.xlu0 %635, %v411
      %v637 = vpop.permute.xlu0 %636
      %639 = vset.pattern.permute.xlu0 1
      %640 = vperm.xlu0 %639, %v412
      %v641 = vpop.permute.xlu0 %640
      %v643 = vlaneseq
      %v644 = vshrl.u32 %v643, 7
      %v645 = vsub.s32 1, %v644
      %v646 = vrot.slane %v391, %v645
      %v647 = vmul.f32 %v565, %v646
      %v648 = vmul.f32 %v569, %v646
      %v649 = vmul.f32 %v573, %v646
      %v650 = vmul.f32 %v577, %v646
      %v651 = vmul.f32 %v581, %v646
      %v652 = vmul.f32 %v585, %v646
      %v653 = vmul.f32 %v589, %v646
      %v654 = vmul.f32 %v593, %v646
      %v655 = vmul.f32 %v597, %v646
      %v656 = vmul.f32 %v601, %v646
      %v657 = vmul.f32 %v605, %v646
      %v658 = vmul.f32 %v609, %v646
      %v659 = vmul.f32 %v613, %v646
      %v660 = vmul.f32 %v617, %v646
      %v661 = vmul.f32 %v621, %v646
      %v662 = vmul.f32 %v625, %v646
      %v663 = vmul.f32 %v629, %v646
      %v664 = vmul.f32 %v633, %v646
      %v665 = vmul.f32 %v637, %v646
      %v666 = vmul.f32 %v641, %v646
      %v667 = vadd.f32 %v543, %v647
      %v668 = vadd.f32 %v544, %v648
      %v669 = vadd.f32 %v545, %v649
      %v670 = vadd.f32 %v546, %v650
      %v671 = vadd.f32 %v547, %v651
      %v672 = vadd.f32 %v548, %v652
      %v673 = vadd.f32 %v549, %v653
      %v674 = vadd.f32 %v550, %v654
      %v675 = vadd.f32 %v551, %v655
      %v676 = vadd.f32 %v552, %v656
      %v677 = vadd.f32 %v553, %v657
      %v678 = vadd.f32 %v554, %v658
      %v679 = vadd.f32 %v555, %v659
      %v680 = vadd.f32 %v556, %v660
      %v681 = vadd.f32 %v557, %v661
      %v682 = vadd.f32 %v558, %v662
      %v683 = vadd.f32 %v559, %v663
      %v684 = vadd.f32 %v560, %v664
      %v685 = vadd.f32 %v561, %v665
      %v686 = vadd.f32 %v562, %v666
      %v687 = vmax.f32 %v667, 0.0
      %v688 = vmax.f32 %v668, 0.0
      %v689 = vmax.f32 %v669, 0.0
      %v690 = vmax.f32 %v670, 0.0
      %v691 = vmax.f32 %v671, 0.0
      %v692 = vmax.f32 %v672, 0.0
      %v693 = vmax.f32 %v673, 0.0
      %v694 = vmax.f32 %v674, 0.0
      %v695 = vmax.f32 %v675, 0.0
      %v696 = vmax.f32 %v676, 0.0
      %v697 = vmax.f32 %v677, 0.0
      %v698 = vmax.f32 %v678, 0.0
      %v699 = vmax.f32 %v679, 0.0
      %v700 = vmax.f32 %v680, 0.0
      %v701 = vmax.f32 %v681, 0.0
      %v702 = vmax.f32 %v682, 0.0
      %v703 = vmax.f32 %v683, 0.0
      %v704 = vmax.f32 %v684, 0.0
      %v705 = vmax.f32 %v685, 0.0
      %v706 = vmax.f32 %v686, 0.0
      %v707 = vld [vmem:[%s3] sm:$0xf]
      %v708 = vld [vmem:[%s3 + $0x4] sm:$0xf]
      %v709 = vld [vmem:[%s3 + $0x8] sm:$0xf]
      %v710 = vld [vmem:[%s3 + $0xc] sm:$0xf]
      %v711 = vld [vmem:[%s3 + $0x10] sm:$0xf]
      %v712 = vld [vmem:[%s3 + $0x14] sm:$0xf]
      %v713 = vld [vmem:[%s3 + $0x18] sm:$0xf]
      %v714 = vld [vmem:[%s3 + $0x1c] sm:$0xf]
      %v715 = vld [vmem:[%s3 + $0x20] sm:$0xf]
      %v716 = vld [vmem:[%s3 + $0x24] sm:$0xf]
      %v717 = vld [vmem:[%s3 + $0x28] sm:$0xf]
      %v718 = vld [vmem:[%s3 + $0x2c] sm:$0xf]
      %v719 = vld [vmem:[%s3 + $0x30] sm:$0xf]
      %v720 = vld [vmem:[%s3 + $0x34] sm:$0xf]
      %v721 = vld [vmem:[%s3 + $0x38] sm:$0xf]
      %v722 = vld [vmem:[%s3 + $0x3c] sm:$0xf]
      %v723 = vld [vmem:[%s4] sm:$0x1]
      %v724 = vpack.c.bf16 %v688, %v687
      %v725 = vpack.c.bf16 %v690, %v689
      %v726 = vpack.c.bf16 %v692, %v691
      %v727 = vpack.c.bf16 %v694, %v693
      %v728 = vpack.c.bf16 %v696, %v695
      %v729 = vpack.c.bf16 %v698, %v697
      %v730 = vpack.c.bf16 %v700, %v699
      %v731 = vpack.c.bf16 %v702, %v701
      %v732 = vpack.c.bf16 %v704, %v703
      %v733 = vpack.c.bf16 %v706, %v705
      %v735 = vlaneseq
      %v736 = vshrl.u32 %v735, 7
      %v737 = vsub.s32 0, %v736
      %v738 = vrot.slane %v723, %v737
      %v756 = vunpack.c.l.b16 %v707
      %v757 = vunpack.c.l.b16 %v708
      %v758 = vunpack.c.l.b16 %v709
      %v759 = vunpack.c.l.b16 %v710
      %v760 = vunpack.c.l.b16 %v711
      %v761 = vunpack.c.l.b16 %v712
      %v762 = vunpack.c.l.b16 %v713
      %v763 = vunpack.c.l.b16 %v714
      %v764 = vunpack.c.l.b16 %v715
      %v765 = vunpack.c.l.b16 %v716
      %v766 = vunpack.c.l.b16 %v717
      %v767 = vunpack.c.l.b16 %v718
      %v768 = vunpack.c.l.b16 %v719
      %v769 = vunpack.c.l.b16 %v720
      %v770 = vunpack.c.l.b16 %v721
      %v771 = vunpack.c.l.b16 %v722
      %v772 = vpack.c.b16 %v757, %v756
      %v773 = vpack.c.b16 %v759, %v758
      %v774 = vpack.c.b16 %v761, %v760
      %v775 = vpack.c.b16 %v763, %v762
      %v776 = vpack.c.b16 %v765, %v764
      %v777 = vpack.c.b16 %v767, %v766
      %v778 = vpack.c.b16 %v769, %v768
      %v779 = vpack.c.b16 %v771, %v770
      %788 = vmatprep.subr.bf16.mxu0 0
      %789 = vmatpush1.bf16.msra.mxu0 %v772
      %790 = vmatprep.subr.bf16.mxu0 0
      %791 = vmatpush1.bf16.msra.mxu0 %v773
      %792 = vmatprep.subr.bf16.mxu0 0
      %793 = vmatpush1.bf16.msra.mxu0 %v774
      %794 = vmatprep.subr.bf16.mxu0 0
      %795 = vmatpush1.bf16.msra.mxu0 %v775
      %796 = vmatprep.subr.bf16.mxu0 0
      %797 = vmatpush1.bf16.msra.mxu0 %v776
      %798 = vmatprep.subr.bf16.mxu0 0
      %799 = vmatpush1.bf16.msra.mxu0 %v777
      %800 = vmatprep.subr.bf16.mxu0 0
      %801 = vmatpush1.bf16.msra.mxu0 %v778
      %802 = vmatprep.subr.bf16.mxu0 0
      %803 = vmatpush1.bf16.msra.mxu0 %v779
      %804 = vmatprep.subr.bf16.mxu0 0
      %805 = vmatpush1.bf16.msra.mxu0 0
      %806 = vmatprep.subr.bf16.mxu0 0
      %807 = vmatpush1.bf16.msra.mxu0 0
      %808 = vmatprep.subr.bf16.mxu0 0
      %809 = vmatpush1.bf16.msra.mxu0 0
      %810 = vmatprep.subr.bf16.mxu0 0
      %811 = vmatpush1.bf16.msra.mxu0 0
      %812 = vmatprep.subr.bf16.mxu0 0
      %813 = vmatpush1.bf16.msra.mxu0 0
      %814 = vmatprep.subr.bf16.mxu0 0
      %815 = vmatpush1.bf16.msra.mxu0 0
      %816 = vmatprep.subr.bf16.mxu0 0
      %817 = vmatpush1.bf16.msra.mxu0 0
      %818 = vmatprep.subr.bf16.mxu0 0
      %819 = vmatpush1.bf16.msra.mxu0 0
      %820 = vmatprep.mubr.bf16.mxu0 0
      %821 = vmatmul.mubr.bf16.gmra.mrb[0].mxu0 %v724
      %v822 = vpop.f32.mrb[0].mxu0
      %v823 = vadd.f32 %v738, %v822
      %v824 = vpop.f32.mrb[0].mxu0
      %v825 = vpop.f32.mrb[0].mxu0
      %v826 = vadd.f32 %v738, %v825
      %v827 = vpop.f32.mrb[0].mxu0
      %828 = vmatprep.mubr.bf16.mxu0 0
      %829 = vmatmul.mubr.bf16.gmra.mrb[0].mxu0 %v725
      %v830 = vpop.f32.mrb[0].mxu0
      %v831 = vadd.f32 %v738, %v830
      %v832 = vpop.f32.mrb[0].mxu0
      %v833 = vpop.f32.mrb[0].mxu0
      %v834 = vadd.f32 %v738, %v833
      %v835 = vpop.f32.mrb[0].mxu0
      %836 = vmatprep.mubr.bf16.mxu0 0
      %837 = vmatmul.mubr.bf16.gmra.mrb[0].mxu0 %v726
      %v838 = vpop.f32.mrb[0].mxu0
      %v839 = vadd.f32 %v738, %v838
      %v840 = vpop.f32.mrb[0].mxu0
      %v841 = vpop.f32.mrb[0].mxu0
      %v842 = vadd.f32 %v738, %v841
      %v843 = vpop.f32.mrb[0].mxu0
      %844 = vmatprep.mubr.bf16.mxu0 0
      %845 = vmatmul.mubr.bf16.gmra.mrb[0].mxu0 %v727
      %v846 = vpop.f32.mrb[0].mxu0
      %v847 = vadd.f32 %v738, %v846
      %v848 = vpop.f32.mrb[0].mxu0
      %v849 = vpop.f32.mrb[0].mxu0
      %v850 = vadd.f32 %v738, %v849
      %v851 = vpop.f32.mrb[0].mxu0
      %852 = vmatprep.mubr.bf16.mxu0 0
      %853 = vmatmul.mubr.bf16.gmra.mrb[0].mxu0 %v728
      %v854 = vpop.f32.mrb[0].mxu0
      %v855 = vadd.f32 %v738, %v854
      %v856 = vpop.f32.mrb[0].mxu0
      %v857 = vpop.f32.mrb[0].mxu0
      %v858 = vadd.f32 %v738, %v857
      %v859 = vpop.f32.mrb[0].mxu0
      %860 = vmatprep.mubr.bf16.mxu0 0
      %861 = vmatmul.mubr.bf16.gmra.mrb[0].mxu0 %v729
      %v862 = vpop.f32.mrb[0].mxu0
      %v863 = vadd.f32 %v738, %v862
      %v864 = vpop.f32.mrb[0].mxu0
      %v865 = vpop.f32.mrb[0].mxu0
      %v866 = vadd.f32 %v738, %v865
      %v867 = vpop.f32.mrb[0].mxu0
      %868 = vmatprep.mubr.bf16.mxu0 0
      %869 = vmatmul.mubr.bf16.gmra.mrb[0].mxu0 %v730
      %v870 = vpop.f32.mrb[0].mxu0
      %v871 = vadd.f32 %v738, %v870
      %v872 = vpop.f32.mrb[0].mxu0
      %v873 = vpop.f32.mrb[0].mxu0
      %v874 = vadd.f32 %v738, %v873
      %v875 = vpop.f32.mrb[0].mxu0
      %876 = vmatprep.mubr.bf16.mxu0 0
      %877 = vmatmul.mubr.bf16.gmra.mrb[0].mxu0 %v731
      %v878 = vpop.f32.mrb[0].mxu0
      %v879 = vadd.f32 %v738, %v878
      %v880 = vpop.f32.mrb[0].mxu0
      %v881 = vpop.f32.mrb[0].mxu0
      %v882 = vadd.f32 %v738, %v881
      %v883 = vpop.f32.mrb[0].mxu0
      %884 = vmatprep.mubr.bf16.mxu0 0
      %885 = vmatmul.mubr.bf16.gmra.mrb[0].mxu0 %v732
      %v886 = vpop.f32.mrb[0].mxu0
      %v887 = vadd.f32 %v738, %v886
      %v888 = vpop.f32.mrb[0].mxu0
      %v889 = vpop.f32.mrb[0].mxu0
      %v890 = vadd.f32 %v738, %v889
      %v891 = vpop.f32.mrb[0].mxu0
      %892 = vmatprep.mubr.bf16.mxu0 0
      %893 = vmatmul.mubr.bf16.gmra.mrb[0].mxu0 %v733
      %v894 = vpop.f32.mrb[0].mxu0
      %v895 = vadd.f32 %v738, %v894
      %v896 = vpop.f32.mrb[0].mxu0
      %v897 = vpop.f32.mrb[0].mxu0
      %v898 = vadd.f32 %v738, %v897
      %v899 = vpop.f32.mrb[0].mxu0
      %900 = vdwg.mxu0
      %v901 = vmax.f32 %v823, 0.0
      %v902 = vmax.f32 %v826, 0.0
      %v903 = vmax.f32 %v831, 0.0
      %v904 = vmax.f32 %v834, 0.0
      %v905 = vmax.f32 %v839, 0.0
      %v906 = vmax.f32 %v842, 0.0
      %v907 = vmax.f32 %v847, 0.0
      %v908 = vmax.f32 %v850, 0.0
      %v909 = vmax.f32 %v855, 0.0
      %v910 = vmax.f32 %v858, 0.0
      %v911 = vmax.f32 %v863, 0.0
      %v912 = vmax.f32 %v866, 0.0
      %v913 = vmax.f32 %v871, 0.0
      %v914 = vmax.f32 %v874, 0.0
      %v915 = vmax.f32 %v879, 0.0
      %v916 = vmax.f32 %v882, 0.0
      %v917 = vmax.f32 %v887, 0.0
      %v918 = vmax.f32 %v890, 0.0
      %v919 = vmax.f32 %v895, 0.0
      %v920 = vmax.f32 %v898, 0.0
      %v921 = vld [vmem:[%s5] sm:$0xf]
      %v922 = vld [vmem:[%s5 + $0x4] sm:$0xf]
      %v923 = vld [vmem:[%s5 + $0x8] sm:$0xf]
      %v924 = vld [vmem:[%s5 + $0xc] sm:$0xf]
      %v925 = vld [vmem:[%s5 + $0x10] sm:$0xf]
      %v926 = vld [vmem:[%s5 + $0x14] sm:$0xf]
      %v927 = vld [vmem:[%s5 + $0x18] sm:$0xf]
      %v928 = vld [vmem:[%s5 + $0x1c] sm:$0xf]
      %v929 = vld [vmem:[%s5 + $0x20] sm:$0xf]
      %v930 = vld [vmem:[%s5 + $0x24] sm:$0xf]
      %v931 = vld [vmem:[%s5 + $0x28] sm:$0xf]
      %v932 = vld [vmem:[%s5 + $0x2c] sm:$0xf]
      %v933 = vld [vmem:[%s5 + $0x30] sm:$0xf]
      %v934 = vld [vmem:[%s5 + $0x34] sm:$0xf]
      %v935 = vld [vmem:[%s5 + $0x38] sm:$0xf]
      %v936 = vld [vmem:[%s5 + $0x3c] sm:$0xf]
      %v937 = vld [vmem:[%s6] sm:$0x1]
      %v938 = vpack.c.bf16 %v902, %v901
      %v939 = vpack.c.bf16 %v904, %v903
      %v940 = vpack.c.bf16 %v906, %v905
      %v941 = vpack.c.bf16 %v908, %v907
      %v942 = vpack.c.bf16 %v910, %v909
      %v943 = vpack.c.bf16 %v912, %v911
      %v944 = vpack.c.bf16 %v914, %v913
      %v945 = vpack.c.bf16 %v916, %v915
      %v946 = vpack.c.bf16 %v918, %v917
      %v947 = vpack.c.bf16 %v920, %v919
      %v949 = vlaneseq
      %v950 = vshrl.u32 %v949, 7
      %v951 = vsub.s32 0, %v950
      %v952 = vrot.slane %v937, %v951
      %v970 = vunpack.c.l.b16 %v921
      %v971 = vunpack.c.l.b16 %v922
      %v972 = vunpack.c.l.b16 %v923
      %v973 = vunpack.c.l.b16 %v924
      %v974 = vunpack.c.l.b16 %v925
      %v975 = vunpack.c.l.b16 %v926
      %v976 = vunpack.c.l.b16 %v927
      %v977 = vunpack.c.l.b16 %v928
      %v978 = vunpack.c.l.b16 %v929
      %v979 = vunpack.c.l.b16 %v930
      %v980 = vunpack.c.l.b16 %v931
      %v981 = vunpack.c.l.b16 %v932
      %v982 = vunpack.c.l.b16 %v933
      %v983 = vunpack.c.l.b16 %v934
      %v984 = vunpack.c.l.b16 %v935
      %v985 = vunpack.c.l.b16 %v936
      %v986 = vpack.c.b16 %v971, %v970
      %v987 = vpack.c.b16 %v973, %v972
      %v988 = vpack.c.b16 %v975, %v974
      %v989 = vpack.c.b16 %v977, %v976
      %v990 = vpack.c.b16 %v979, %v978
      %v991 = vpack.c.b16 %v981, %v980
      %v992 = vpack.c.b16 %v983, %v982
      %v993 = vpack.c.b16 %v985, %v984
      %1002 = vmatprep.subr.bf16.mxu0 0
      %1003 = vmatpush1.bf16.msra.mxu0 %v986
      %1004 = vmatprep.subr.bf16.mxu0 0
      %1005 = vmatpush1.bf16.msra.mxu0 %v987
      %1006 = vmatprep.subr.bf16.mxu0 0
      %1007 = vmatpush1.bf16.msra.mxu0 %v988
      %1008 = vmatprep.subr.bf16.mxu0 0
      %1009 = vmatpush1.bf16.msra.mxu0 %v989
      %1010 = vmatprep.subr.bf16.mxu0 0
      %1011 = vmatpush1.bf16.msra.mxu0 %v990
      %1012 = vmatprep.subr.bf16.mxu0 0
      %1013 = vmatpush1.bf16.msra.mxu0 %v991
      %1014 = vmatprep.subr.bf16.mxu0 0
      %1015 = vmatpush1.bf16.msra.mxu0 %v992
      %1016 = vmatprep.subr.bf16.mxu0 0
      %1017 = vmatpush1.bf16.msra.mxu0 %v993
      %1018 = vmatprep.subr.bf16.mxu0 0
      %1019 = vmatpush1.bf16.msra.mxu0 0
      %1020 = vmatprep.subr.bf16.mxu0 0
      %1021 = vmatpush1.bf16.msra.mxu0 0
      %1022 = vmatprep.subr.bf16.mxu0 0
      %1023 = vmatpush1.bf16.msra.mxu0 0
      %1024 = vmatprep.subr.bf16.mxu0 0
      %1025 = vmatpush1.bf16.msra.mxu0 0
      %1026 = vmatprep.subr.bf16.mxu0 0
      %1027 = vmatpush1.bf16.msra.mxu0 0
      %1028 = vmatprep.subr.bf16.mxu0 0
      %1029 = vmatpush1.bf16.msra.mxu0 0
      %1030 = vmatprep.subr.bf16.mxu0 0
      %1031 = vmatpush1.bf16.msra.mxu0 0
      %1032 = vmatprep.subr.bf16.mxu0 0
      %1033 = vmatpush1.bf16.msra.mxu0 0
      %1034 = vmatprep.mubr.bf16.mxu0 0
      %1035 = vmatmul.mubr.bf16.gmra.mrb[0].mxu0 %v938
      %v1036 = vpop.f32.mrb[0].mxu0
      %v1037 = vadd.f32 %v952, %v1036
      %v1038 = vpop.f32.mrb[0].mxu0
      %v1039 = vpop.f32.mrb[0].mxu0
      %v1040 = vadd.f32 %v952, %v1039
      %v1041 = vpop.f32.mrb[0].mxu0
      %1042 = vmatprep.mubr.bf16.mxu0 0
      %1043 = vmatmul.mubr.bf16.gmra.mrb[0].mxu0 %v939
      %v1044 = vpop.f32.mrb[0].mxu0
      %v1045 = vadd.f32 %v952, %v1044
      %v1046 = vpop.f32.mrb[0].mxu0
      %v1047 = vpop.f32.mrb[0].mxu0
      %v1048 = vadd.f32 %v952, %v1047
      %v1049 = vpop.f32.mrb[0].mxu0
      %1050 = vmatprep.mubr.bf16.mxu0 0
      %1051 = vmatmul.mubr.bf16.gmra.mrb[0].mxu0 %v940
      %v1052 = vpop.f32.mrb[0].mxu0
      %v1053 = vadd.f32 %v952, %v1052
      %v1054 = vpop.f32.mrb[0].mxu0
      %v1055 = vpop.f32.mrb[0].mxu0
      %v1056 = vadd.f32 %v952, %v1055
      %v1057 = vpop.f32.mrb[0].mxu0
      %1058 = vmatprep.mubr.bf16.mxu0 0
      %1059 = vmatmul.mubr.bf16.gmra.mrb[0].mxu0 %v941
      %v1060 = vpop.f32.mrb[0].mxu0
      %v1061 = vadd.f32 %v952, %v1060
      %v1062 = vpop.f32.mrb[0].mxu0
      %v1063 = vpop.f32.mrb[0].mxu0
      %v1064 = vadd.f32 %v952, %v1063
      %v1065 = vpop.f32.mrb[0].mxu0
      %1066 = vmatprep.mubr.bf16.mxu0 0
      %1067 = vmatmul.mubr.bf16.gmra.mrb[0].mxu0 %v942
      %v1068 = vpop.f32.mrb[0].mxu0
      %v1069 = vadd.f32 %v952, %v1068
      %v1070 = vpop.f32.mrb[0].mxu0
      %v1071 = vpop.f32.mrb[0].mxu0
      %v1072 = vadd.f32 %v952, %v1071
      %v1073 = vpop.f32.mrb[0].mxu0
      %1074 = vmatprep.mubr.bf16.mxu0 0
      %1075 = vmatmul.mubr.bf16.gmra.mrb[0].mxu0 %v943
      %v1076 = vpop.f32.mrb[0].mxu0
      %v1077 = vadd.f32 %v952, %v1076
      %v1078 = vpop.f32.mrb[0].mxu0
      %v1079 = vpop.f32.mrb[0].mxu0
      %v1080 = vadd.f32 %v952, %v1079
      %v1081 = vpop.f32.mrb[0].mxu0
      %1082 = vmatprep.mubr.bf16.mxu0 0
      %1083 = vmatmul.mubr.bf16.gmra.mrb[0].mxu0 %v944
      %v1084 = vpop.f32.mrb[0].mxu0
      %v1085 = vadd.f32 %v952, %v1084
      %v1086 = vpop.f32.mrb[0].mxu0
      %v1087 = vpop.f32.mrb[0].mxu0
      %v1088 = vadd.f32 %v952, %v1087
      %v1089 = vpop.f32.mrb[0].mxu0
      %1090 = vmatprep.mubr.bf16.mxu0 0
      %1091 = vmatmul.mubr.bf16.gmra.mrb[0].mxu0 %v945
      %v1092 = vpop.f32.mrb[0].mxu0
      %v1093 = vadd.f32 %v952, %v1092
      %v1094 = vpop.f32.mrb[0].mxu0
      %v1095 = vpop.f32.mrb[0].mxu0
      %v1096 = vadd.f32 %v952, %v1095
      %v1097 = vpop.f32.mrb[0].mxu0
      %1098 = vmatprep.mubr.bf16.mxu0 0
      %1099 = vmatmul.mubr.bf16.gmra.mrb[0].mxu0 %v946
      %v1100 = vpop.f32.mrb[0].mxu0
      %v1101 = vadd.f32 %v952, %v1100
      %v1102 = vpop.f32.mrb[0].mxu0
      %v1103 = vpop.f32.mrb[0].mxu0
      %v1104 = vadd.f32 %v952, %v1103
      %v1105 = vpop.f32.mrb[0].mxu0
      %1106 = vmatprep.mubr.bf16.mxu0 0
      %1107 = vmatmul.mubr.bf16.gmra.mrb[0].mxu0 %v947
      %v1108 = vpop.f32.mrb[0].mxu0
      %v1109 = vadd.f32 %v952, %v1108
      %v1110 = vpop.f32.mrb[0].mxu0
      %v1111 = vpop.f32.mrb[0].mxu0
      %v1112 = vadd.f32 %v952, %v1111
      %v1113 = vpop.f32.mrb[0].mxu0
      %1114 = vdwg.mxu0
      %v1115 = vmax.f32 %v1037, 0.0
      %v1116 = vmax.f32 %v1040, 0.0
      %v1117 = vmax.f32 %v1045, 0.0
      %v1118 = vmax.f32 %v1048, 0.0
      %v1119 = vmax.f32 %v1053, 0.0
      %v1120 = vmax.f32 %v1056, 0.0
      %v1121 = vmax.f32 %v1061, 0.0
      %v1122 = vmax.f32 %v1064, 0.0
      %v1123 = vmax.f32 %v1069, 0.0
      %v1124 = vmax.f32 %v1072, 0.0
      %v1125 = vmax.f32 %v1077, 0.0
      %v1126 = vmax.f32 %v1080, 0.0
      %v1127 = vmax.f32 %v1085, 0.0
      %v1128 = vmax.f32 %v1088, 0.0
      %v1129 = vmax.f32 %v1093, 0.0
      %v1130 = vmax.f32 %v1096, 0.0
      %v1131 = vmax.f32 %v1101, 0.0
      %v1132 = vmax.f32 %v1104, 0.0
      %v1133 = vmax.f32 %v1109, 0.0
      %v1134 = vmax.f32 %v1112, 0.0
      %v1135 = vld [vmem:[%s7] sm:$0xf]
      %v1136 = vld [vmem:[%s7 + $0x4] sm:$0xf]
      %v1137 = vld [vmem:[%s7 + $0x8] sm:$0xf]
      %v1138 = vld [vmem:[%s7 + $0xc] sm:$0xf]
      %v1139 = vld [vmem:[%s7 + $0x10] sm:$0xf]
      %v1140 = vld [vmem:[%s7 + $0x14] sm:$0xf]
      %v1141 = vld [vmem:[%s7 + $0x18] sm:$0xf]
      %v1142 = vld [vmem:[%s7 + $0x1c] sm:$0xf]
      %v1143 = vld [vmem:[%s7 + $0x20] sm:$0xf]
      %v1144 = vld [vmem:[%s7 + $0x24] sm:$0xf]
      %v1145 = vld [vmem:[%s7 + $0x28] sm:$0xf]
      %v1146 = vld [vmem:[%s7 + $0x2c] sm:$0xf]
      %v1147 = vld [vmem:[%s7 + $0x30] sm:$0xf]
      %v1148 = vld [vmem:[%s7 + $0x34] sm:$0xf]
      %v1149 = vld [vmem:[%s7 + $0x38] sm:$0xf]
      %v1150 = vld [vmem:[%s7 + $0x3c] sm:$0xf]
      %v1151 = vld [vmem:[%s8] sm:$0x1]
      %v1152 = vpack.c.bf16 %v1116, %v1115
      %v1153 = vpack.c.bf16 %v1118, %v1117
      %v1154 = vpack.c.bf16 %v1120, %v1119
      %v1155 = vpack.c.bf16 %v1122, %v1121
      %v1156 = vpack.c.bf16 %v1124, %v1123
      %v1157 = vpack.c.bf16 %v1126, %v1125
      %v1158 = vpack.c.bf16 %v1128, %v1127
      %v1159 = vpack.c.bf16 %v1130, %v1129
      %v1160 = vpack.c.bf16 %v1132, %v1131
      %v1161 = vpack.c.bf16 %v1134, %v1133
      %v1163 = vlaneseq
      %v1164 = vshrl.u32 %v1163, 7
      %v1165 = vsub.s32 0, %v1164
      %v1166 = vrot.slane %v1151, %v1165
      %v1184 = vunpack.c.l.b16 %v1135
      %v1185 = vunpack.c.l.b16 %v1136
      %v1186 = vunpack.c.l.b16 %v1137
      %v1187 = vunpack.c.l.b16 %v1138
      %v1188 = vunpack.c.l.b16 %v1139
      %v1189 = vunpack.c.l.b16 %v1140
      %v1190 = vunpack.c.l.b16 %v1141
      %v1191 = vunpack.c.l.b16 %v1142
      %v1192 = vunpack.c.l.b16 %v1143
      %v1193 = vunpack.c.l.b16 %v1144
      %v1194 = vunpack.c.l.b16 %v1145
      %v1195 = vunpack.c.l.b16 %v1146
      %v1196 = vunpack.c.l.b16 %v1147
      %v1197 = vunpack.c.l.b16 %v1148
      %v1198 = vunpack.c.l.b16 %v1149
      %v1199 = vunpack.c.l.b16 %v1150
      %v1200 = vpack.c.b16 %v1185, %v1184
      %v1201 = vpack.c.b16 %v1187, %v1186
      %v1202 = vpack.c.b16 %v1189, %v1188
      %v1203 = vpack.c.b16 %v1191, %v1190
      %v1204 = vpack.c.b16 %v1193, %v1192
      %v1205 = vpack.c.b16 %v1195, %v1194
      %v1206 = vpack.c.b16 %v1197, %v1196
      %v1207 = vpack.c.b16 %v1199, %v1198
      %1216 = vmatprep.subr.bf16.mxu0 0
      %1217 = vmatpush1.bf16.msra.mxu0 %v1200
      %1218 = vmatprep.subr.bf16.mxu0 0
      %1219 = vmatpush1.bf16.msra.mxu0 %v1201
      %1220 = vmatprep.subr.bf16.mxu0 0
      %1221 = vmatpush1.bf16.msra.mxu0 %v1202
      %1222 = vmatprep.subr.bf16.mxu0 0
      %1223 = vmatpush1.bf16.msra.mxu0 %v1203
      %1224 = vmatprep.subr.bf16.mxu0 0
      %1225 = vmatpush1.bf16.msra.mxu0 %v1204
      %1226 = vmatprep.subr.bf16.mxu0 0
      %1227 = vmatpush1.bf16.msra.mxu0 %v1205
      %1228 = vmatprep.subr.bf16.mxu0 0
      %1229 = vmatpush1.bf16.msra.mxu0 %v1206
      %1230 = vmatprep.subr.bf16.mxu0 0
      %1231 = vmatpush1.bf16.msra.mxu0 %v1207
      %1232 = vmatprep.subr.bf16.mxu0 0
      %1233 = vmatpush1.bf16.msra.mxu0 0
      %1234 = vmatprep.subr.bf16.mxu0 0
      %1235 = vmatpush1.bf16.msra.mxu0 0
      %1236 = vmatprep.subr.bf16.mxu0 0
      %1237 = vmatpush1.bf16.msra.mxu0 0
      %1238 = vmatprep.subr.bf16.mxu0 0
      %1239 = vmatpush1.bf16.msra.mxu0 0
      %1240 = vmatprep.subr.bf16.mxu0 0
      %1241 = vmatpush1.bf16.msra.mxu0 0
      %1242 = vmatprep.subr.bf16.mxu0 0
      %1243 = vmatpush1.bf16.msra.mxu0 0
      %1244 = vmatprep.subr.bf16.mxu0 0
      %1245 = vmatpush1.bf16.msra.mxu0 0
      %1246 = vmatprep.subr.bf16.mxu0 0
      %1247 = vmatpush1.bf16.msra.mxu0 0
      %1248 = vmatprep.mubr.bf16.mxu0 0
      %1249 = vmatmul.mubr.bf16.gmra.mrb[0].mxu0 %v1152
      %v1250 = vpop.f32.mrb[0].mxu0
      %v1251 = vadd.f32 %v1166, %v1250
      %v1252 = vpop.f32.mrb[0].mxu0
      %v1253 = vpop.f32.mrb[0].mxu0
      %v1254 = vadd.f32 %v1166, %v1253
      %v1255 = vpop.f32.mrb[0].mxu0
      %1256 = vmatprep.mubr.bf16.mxu0 0
      %1257 = vmatmul.mubr.bf16.gmra.mrb[0].mxu0 %v1153
      %v1258 = vpop.f32.mrb[0].mxu0
      %v1259 = vadd.f32 %v1166, %v1258
      %v1260 = vpop.f32.mrb[0].mxu0
      %v1261 = vpop.f32.mrb[0].mxu0
      %v1262 = vadd.f32 %v1166, %v1261
      %v1263 = vpop.f32.mrb[0].mxu0
      %1264 = vmatprep.mubr.bf16.mxu0 0
      %1265 = vmatmul.mubr.bf16.gmra.mrb[0].mxu0 %v1154
      %v1266 = vpop.f32.mrb[0].mxu0
      %v1267 = vadd.f32 %v1166, %v1266
      %v1268 = vpop.f32.mrb[0].mxu0
      %v1269 = vpop.f32.mrb[0].mxu0
      %v1270 = vadd.f32 %v1166, %v1269
      %v1271 = vpop.f32.mrb[0].mxu0
      %1272 = vmatprep.mubr.bf16.mxu0 0
      %1273 = vmatmul.mubr.bf16.gmra.mrb[0].mxu0 %v1155
      %v1274 = vpop.f32.mrb[0].mxu0
      %v1275 = vadd.f32 %v1166, %v1274
      %v1276 = vpop.f32.mrb[0].mxu0
      %v1277 = vpop.f32.mrb[0].mxu0
      %v1278 = vadd.f32 %v1166, %v1277
      %v1279 = vpop.f32.mrb[0].mxu0
      %1280 = vmatprep.mubr.bf16.mxu0 0
      %1281 = vmatmul.mubr.bf16.gmra.mrb[0].mxu0 %v1156
      %v1282 = vpop.f32.mrb[0].mxu0
      %v1283 = vadd.f32 %v1166, %v1282
      %v1284 = vpop.f32.mrb[0].mxu0
      %v1285 = vpop.f32.mrb[0].mxu0
      %v1286 = vadd.f32 %v1166, %v1285
      %v1287 = vpop.f32.mrb[0].mxu0
      %1288 = vmatprep.mubr.bf16.mxu0 0
      %1289 = vmatmul.mubr.bf16.gmra.mrb[0].mxu0 %v1157
      %v1290 = vpop.f32.mrb[0].mxu0
      %v1291 = vadd.f32 %v1166, %v1290
      %v1292 = vpop.f32.mrb[0].mxu0
      %v1293 = vpop.f32.mrb[0].mxu0
      %v1294 = vadd.f32 %v1166, %v1293
      %v1295 = vpop.f32.mrb[0].mxu0
      %1296 = vmatprep.mubr.bf16.mxu0 0
      %1297 = vmatmul.mubr.bf16.gmra.mrb[0].mxu0 %v1158
      %v1298 = vpop.f32.mrb[0].mxu0
      %v1299 = vadd.f32 %v1166, %v1298
      %v1300 = vpop.f32.mrb[0].mxu0
      %v1301 = vpop.f32.mrb[0].mxu0
      %v1302 = vadd.f32 %v1166, %v1301
      %v1303 = vpop.f32.mrb[0].mxu0
      %1304 = vmatprep.mubr.bf16.mxu0 0
      %1305 = vmatmul.mubr.bf16.gmra.mrb[0].mxu0 %v1159
      %v1306 = vpop.f32.mrb[0].mxu0
      %v1307 = vadd.f32 %v1166, %v1306
      %v1308 = vpop.f32.mrb[0].mxu0
      %v1309 = vpop.f32.mrb[0].mxu0
      %v1310 = vadd.f32 %v1166, %v1309
      %v1311 = vpop.f32.mrb[0].mxu0
      %1312 = vmatprep.mubr.bf16.mxu0 0
      %1313 = vmatmul.mubr.bf16.gmra.mrb[0].mxu0 %v1160
      %v1314 = vpop.f32.mrb[0].mxu0
      %v1315 = vadd.f32 %v1166, %v1314
      %v1316 = vpop.f32.mrb[0].mxu0
      %v1317 = vpop.f32.mrb[0].mxu0
      %v1318 = vadd.f32 %v1166, %v1317
      %v1319 = vpop.f32.mrb[0].mxu0
      %1320 = vmatprep.mubr.bf16.mxu0 0
      %1321 = vmatmul.mubr.bf16.gmra.mrb[0].mxu0 %v1161
      %v1322 = vpop.f32.mrb[0].mxu0
      %v1323 = vadd.f32 %v1166, %v1322
      %v1324 = vpop.f32.mrb[0].mxu0
      %v1325 = vpop.f32.mrb[0].mxu0
      %v1326 = vadd.f32 %v1166, %v1325
      %v1327 = vpop.f32.mrb[0].mxu0
      %1328 = vdwg.mxu0
      %v1329 = vmax.f32 %v1251, 0.0
      %v1330 = vmax.f32 %v1254, 0.0
      %v1331 = vmax.f32 %v1259, 0.0
      %v1332 = vmax.f32 %v1262, 0.0
      %v1333 = vmax.f32 %v1267, 0.0
      %v1334 = vmax.f32 %v1270, 0.0
      %v1335 = vmax.f32 %v1275, 0.0
      %v1336 = vmax.f32 %v1278, 0.0
      %v1337 = vmax.f32 %v1283, 0.0
      %v1338 = vmax.f32 %v1286, 0.0
      %v1339 = vmax.f32 %v1291, 0.0
      %v1340 = vmax.f32 %v1294, 0.0
      %v1341 = vmax.f32 %v1299, 0.0
      %v1342 = vmax.f32 %v1302, 0.0
      %v1343 = vmax.f32 %v1307, 0.0
      %v1344 = vmax.f32 %v1310, 0.0
      %v1345 = vmax.f32 %v1315, 0.0
      %v1346 = vmax.f32 %v1318, 0.0
      %v1347 = vmax.f32 %v1323, 0.0
      %v1348 = vmax.f32 %v1326, 0.0
      %v1349 = vld [vmem:[%s9] sm:$0xf]
      %v1350 = vld [vmem:[%s9 + $0x4] sm:$0xf]
      %v1351 = vld [vmem:[%s9 + $0x8] sm:$0xf]
      %v1352 = vld [vmem:[%s9 + $0xc] sm:$0xf]
      %v1353 = vld [vmem:[%s9 + $0x10] sm:$0xf]
      %v1354 = vld [vmem:[%s9 + $0x14] sm:$0xf]
      %v1355 = vld [vmem:[%s9 + $0x18] sm:$0xf]
      %v1356 = vld [vmem:[%s9 + $0x1c] sm:$0xf]
      %v1357 = vld [vmem:[%s9 + $0x20] sm:$0xf]
      %v1358 = vld [vmem:[%s9 + $0x24] sm:$0xf]
      %v1359 = vld [vmem:[%s9 + $0x28] sm:$0xf]
      %v1360 = vld [vmem:[%s9 + $0x2c] sm:$0xf]
      %v1361 = vld [vmem:[%s9 + $0x30] sm:$0xf]
      %v1362 = vld [vmem:[%s9 + $0x34] sm:$0xf]
      %v1363 = vld [vmem:[%s9 + $0x38] sm:$0xf]
      %v1364 = vld [vmem:[%s9 + $0x3c] sm:$0xf]
      %v1365 = vld [vmem:[%s10] sm:$0x1]
      %v1366 = vpack.c.bf16 %v1330, %v1329
      %v1367 = vpack.c.bf16 %v1332, %v1331
      %v1368 = vpack.c.bf16 %v1334, %v1333
      %v1369 = vpack.c.bf16 %v1336, %v1335
      %v1370 = vpack.c.bf16 %v1338, %v1337
      %v1371 = vpack.c.bf16 %v1340, %v1339
      %v1372 = vpack.c.bf16 %v1342, %v1341
      %v1373 = vpack.c.bf16 %v1344, %v1343
      %v1374 = vpack.c.bf16 %v1346, %v1345
      %v1375 = vpack.c.bf16 %v1348, %v1347
      %v1377 = vlaneseq
      %v1378 = vshrl.u32 %v1377, 7
      %v1379 = vsub.s32 0, %v1378
      %v1380 = vrot.slane %v1365, %v1379
      %v1398 = vunpack.c.l.b16 %v1349
      %v1399 = vunpack.c.l.b16 %v1350
      %v1400 = vunpack.c.l.b16 %v1351
      %v1401 = vunpack.c.l.b16 %v1352
      %v1402 = vunpack.c.l.b16 %v1353
      %v1403 = vunpack.c.l.b16 %v1354
      %v1404 = vunpack.c.l.b16 %v1355
      %v1405 = vunpack.c.l.b16 %v1356
      %v1406 = vunpack.c.l.b16 %v1357
      %v1407 = vunpack.c.l.b16 %v1358
      %v1408 = vunpack.c.l.b16 %v1359
      %v1409 = vunpack.c.l.b16 %v1360
      %v1410 = vunpack.c.l.b16 %v1361
      %v1411 = vunpack.c.l.b16 %v1362
      %v1412 = vunpack.c.l.b16 %v1363
      %v1413 = vunpack.c.l.b16 %v1364
      %v1414 = vpack.c.b16 %v1399, %v1398
      %v1415 = vpack.c.b16 %v1401, %v1400
      %v1416 = vpack.c.b16 %v1403, %v1402
      %v1417 = vpack.c.b16 %v1405, %v1404
      %v1418 = vpack.c.b16 %v1407, %v1406
      %v1419 = vpack.c.b16 %v1409, %v1408
      %v1420 = vpack.c.b16 %v1411, %v1410
      %v1421 = vpack.c.b16 %v1413, %v1412
      %1430 = vmatprep.subr.bf16.mxu0 0
      %1431 = vmatpush1.bf16.msra.mxu0 %v1414
      %1432 = vmatprep.subr.bf16.mxu0 0
      %1433 = vmatpush1.bf16.msra.mxu0 %v1415
      %1434 = vmatprep.subr.bf16.mxu0 0
      %1435 = vmatpush1.bf16.msra.mxu0 %v1416
      %1436 = vmatprep.subr.bf16.mxu0 0
      %1437 = vmatpush1.bf16.msra.mxu0 %v1417
      %1438 = vmatprep.subr.bf16.mxu0 0
      %1439 = vmatpush1.bf16.msra.mxu0 %v1418
      %1440 = vmatprep.subr.bf16.mxu0 0
      %1441 = vmatpush1.bf16.msra.mxu0 %v1419
      %1442 = vmatprep.subr.bf16.mxu0 0
      %1443 = vmatpush1.bf16.msra.mxu0 %v1420
      %1444 = vmatprep.subr.bf16.mxu0 0
      %1445 = vmatpush1.bf16.msra.mxu0 %v1421
      %1446 = vmatprep.subr.bf16.mxu0 0
      %1447 = vmatpush1.bf16.msra.mxu0 0
      %1448 = vmatprep.subr.bf16.mxu0 0
      %1449 = vmatpush1.bf16.msra.mxu0 0
      %1450 = vmatprep.subr.bf16.mxu0 0
      %1451 = vmatpush1.bf16.msra.mxu0 0
      %1452 = vmatprep.subr.bf16.mxu0 0
      %1453 = vmatpush1.bf16.msra.mxu0 0
      %1454 = vmatprep.subr.bf16.mxu0 0
      %1455 = vmatpush1.bf16.msra.mxu0 0
      %1456 = vmatprep.subr.bf16.mxu0 0
      %1457 = vmatpush1.bf16.msra.mxu0 0
      %1458 = vmatprep.subr.bf16.mxu0 0
      %1459 = vmatpush1.bf16.msra.mxu0 0
      %1460 = vmatprep.subr.bf16.mxu0 0
      %1461 = vmatpush1.bf16.msra.mxu0 0
      %1462 = vmatprep.mubr.bf16.mxu0 0
      %1463 = vmatmul.mubr.bf16.gmra.mrb[0].mxu0 %v1366
      %v1464 = vpop.f32.mrb[0].mxu0
      %v1465 = vadd.f32 %v1380, %v1464
      %v1466 = vpop.f32.mrb[0].mxu0
      %v1467 = vpop.f32.mrb[0].mxu0
      %v1468 = vadd.f32 %v1380, %v1467
      %v1469 = vpop.f32.mrb[0].mxu0
      %1470 = vmatprep.mubr.bf16.mxu0 0
      %1471 = vmatmul.mubr.bf16.gmra.mrb[0].mxu0 %v1367
      %v1472 = vpop.f32.mrb[0].mxu0
      %v1473 = vadd.f32 %v1380, %v1472
      %v1474 = vpop.f32.mrb[0].mxu0
      %v1475 = vpop.f32.mrb[0].mxu0
      %v1476 = vadd.f32 %v1380, %v1475
      %v1477 = vpop.f32.mrb[0].mxu0
      %1478 = vmatprep.mubr.bf16.mxu0 0
      %1479 = vmatmul.mubr.bf16.gmra.mrb[0].mxu0 %v1368
      %v1480 = vpop.f32.mrb[0].mxu0
      %v1481 = vadd.f32 %v1380, %v1480
      %v1482 = vpop.f32.mrb[0].mxu0
      %v1483 = vpop.f32.mrb[0].mxu0
      %v1484 = vadd.f32 %v1380, %v1483
      %v1485 = vpop.f32.mrb[0].mxu0
      %1486 = vmatprep.mubr.bf16.mxu0 0
      %1487 = vmatmul.mubr.bf16.gmra.mrb[0].mxu0 %v1369
      %v1488 = vpop.f32.mrb[0].mxu0
      %v1489 = vadd.f32 %v1380, %v1488
      %v1490 = vpop.f32.mrb[0].mxu0
      %v1491 = vpop.f32.mrb[0].mxu0
      %v1492 = vadd.f32 %v1380, %v1491
      %v1493 = vpop.f32.mrb[0].mxu0
      %1494 = vmatprep.mubr.bf16.mxu0 0
      %1495 = vmatmul.mubr.bf16.gmra.mrb[0].mxu0 %v1370
      %v1496 = vpop.f32.mrb[0].mxu0
      %v1497 = vadd.f32 %v1380, %v1496
      %v1498 = vpop.f32.mrb[0].mxu0
      %v1499 = vpop.f32.mrb[0].mxu0
      %v1500 = vadd.f32 %v1380, %v1499
      %v1501 = vpop.f32.mrb[0].mxu0
      %1502 = vmatprep.mubr.bf16.mxu0 0
      %1503 = vmatmul.mubr.bf16.gmra.mrb[0].mxu0 %v1371
      %v1504 = vpop.f32.mrb[0].mxu0
      %v1505 = vadd.f32 %v1380, %v1504
      %v1506 = vpop.f32.mrb[0].mxu0
      %v1507 = vpop.f32.mrb[0].mxu0
      %v1508 = vadd.f32 %v1380, %v1507
      %v1509 = vpop.f32.mrb[0].mxu0
      %1510 = vmatprep.mubr.bf16.mxu0 0
      %1511 = vmatmul.mubr.bf16.gmra.mrb[0].mxu0 %v1372
      %v1512 = vpop.f32.mrb[0].mxu0
      %v1513 = vadd.f32 %v1380, %v1512
      %v1514 = vpop.f32.mrb[0].mxu0
      %v1515 = vpop.f32.mrb[0].mxu0
      %v1516 = vadd.f32 %v1380, %v1515
      %v1517 = vpop.f32.mrb[0].mxu0
      %1518 = vmatprep.mubr.bf16.mxu0 0
      %1519 = vmatmul.mubr.bf16.gmra.mrb[0].mxu0 %v1373
      %v1520 = vpop.f32.mrb[0].mxu0
      %v1521 = vadd.f32 %v1380, %v1520
      %v1522 = vpop.f32.mrb[0].mxu0
      %v1523 = vpop.f32.mrb[0].mxu0
      %v1524 = vadd.f32 %v1380, %v1523
      %v1525 = vpop.f32.mrb[0].mxu0
      %1526 = vmatprep.mubr.bf16.mxu0 0
      %1527 = vmatmul.mubr.bf16.gmra.mrb[0].mxu0 %v1374
      %v1528 = vpop.f32.mrb[0].mxu0
      %v1529 = vadd.f32 %v1380, %v1528
      %v1530 = vpop.f32.mrb[0].mxu0
      %v1531 = vpop.f32.mrb[0].mxu0
      %v1532 = vadd.f32 %v1380, %v1531
      %v1533 = vpop.f32.mrb[0].mxu0
      %1534 = vmatprep.mubr.bf16.mxu0 0
      %1535 = vmatmul.mubr.bf16.gmra.mrb[0].mxu0 %v1375
      %v1536 = vpop.f32.mrb[0].mxu0
      %v1537 = vadd.f32 %v1380, %v1536
      %v1538 = vpop.f32.mrb[0].mxu0
      %v1539 = vpop.f32.mrb[0].mxu0
      %v1540 = vadd.f32 %v1380, %v1539
      %v1541 = vpop.f32.mrb[0].mxu0
      %1542 = vdwg.mxu0
      %v1543 = vtanh.pop %v1465
      %v1544 = vtanh.pop %v1468
      %v1545 = vtanh.pop %v1473
      %v1546 = vtanh.pop %v1476
      %v1547 = vtanh.pop %v1481
      %v1548 = vtanh.pop %v1484
      %v1549 = vtanh.pop %v1489
      %v1550 = vtanh.pop %v1492
      %v1551 = vtanh.pop %v1497
      %v1552 = vtanh.pop %v1500
      %v1553 = vtanh.pop %v1505
      %v1554 = vtanh.pop %v1508
      %v1555 = vtanh.pop %v1513
      %v1556 = vtanh.pop %v1516
      %v1557 = vtanh.pop %v1521
      %v1558 = vtanh.pop %v1524
      %v1559 = vtanh.pop %v1529
      %v1560 = vtanh.pop %v1532
      %v1561 = vtanh.pop %v1537
      %v1562 = vtanh.pop %v1540
      %v1563 = vpack.c.bf16 %v1544, %v1543
      %v1564 = vpack.c.bf16 %v1546, %v1545
      %v1565 = vpack.c.bf16 %v1548, %v1547
      %v1566 = vpack.c.bf16 %v1550, %v1549
      %v1567 = vpack.c.bf16 %v1552, %v1551
      %v1568 = vpack.c.bf16 %v1554, %v1553
      %v1569 = vpack.c.bf16 %v1556, %v1555
      %v1570 = vpack.c.bf16 %v1558, %v1557
      %v1571 = vpack.c.bf16 %v1560, %v1559
      %v1572 = vpack.c.bf16 %v1562, %v1561
      %v1583 = vunpack.c.l.b16 %v1563
      %v1584 = vunpack.c.h.b16 %v1563
      %v1585 = vunpack.c.l.b16 %v1564
      %v1586 = vunpack.c.h.b16 %v1564
      %v1587 = vunpack.c.l.b16 %v1565
      %v1588 = vunpack.c.h.b16 %v1565
      %v1589 = vunpack.c.l.b16 %v1566
      %v1590 = vunpack.c.h.b16 %v1566
      %v1591 = vunpack.c.l.b16 %v1567
      %v1592 = vunpack.c.h.b16 %v1567
      %v1593 = vunpack.c.l.b16 %v1568
      %v1594 = vunpack.c.h.b16 %v1568
      %v1595 = vunpack.c.l.b16 %v1569
      %v1596 = vunpack.c.h.b16 %v1569
      %v1597 = vunpack.c.l.b16 %v1570
      %v1598 = vunpack.c.h.b16 %v1570
      %v1599 = vunpack.c.l.b16 %v1571
      %v1600 = vunpack.c.h.b16 %v1571
      %v1601 = vunpack.c.l.b16 %v1572
      %v1602 = vunpack.c.h.b16 %v1572
      %v1603 = vpack.c.b16 %v1583, %v1583
      %v1604 = vpack.c.b16 %v1584, %v1584
      %v1605 = vpack.c.b16 %v1585, %v1585
      %v1606 = vpack.c.b16 %v1586, %v1586
      %v1607 = vpack.c.b16 %v1587, %v1587
      %v1608 = vpack.c.b16 %v1588, %v1588
      %v1609 = vpack.c.b16 %v1589, %v1589
      %v1610 = vpack.c.b16 %v1590, %v1590
      %v1611 = vpack.c.b16 %v1591, %v1591
      %v1612 = vpack.c.b16 %v1592, %v1592
      %v1613 = vpack.c.b16 %v1593, %v1593
      %v1614 = vpack.c.b16 %v1594, %v1594
      %v1615 = vpack.c.b16 %v1595, %v1595
      %v1616 = vpack.c.b16 %v1596, %v1596
      %v1617 = vpack.c.b16 %v1597, %v1597
      %v1618 = vpack.c.b16 %v1598, %v1598
      %v1619 = vpack.c.b16 %v1599, %v1599
      %v1620 = vpack.c.b16 %v1600, %v1600
      %v1621 = vpack.c.b16 %v1601, %v1601
      %v1622 = vpack.c.b16 %v1602, %v1602
      %1643 = vst [vmem:[%s388] sm:$0xf] %v1603
      %1644 = vst [vmem:[%s388 + $0x4] sm:$0xf] %v1604
      %1645 = vst [vmem:[%s388 + $0x8] sm:$0xf] %v1605
      %1646 = vst [vmem:[%s388 + $0xc] sm:$0xf] %v1606
      %1647 = vst [vmem:[%s388 + $0x10] sm:$0xf] %v1607
      %1648 = vst [vmem:[%s388 + $0x14] sm:$0xf] %v1608
      %1649 = vst [vmem:[%s388 + $0x18] sm:$0xf] %v1609
      %1650 = vst [vmem:[%s388 + $0x1c] sm:$0xf] %v1610
      %1651 = vst [vmem:[%s388 + $0x20] sm:$0xf] %v1611
      %1652 = vst [vmem:[%s388 + $0x24] sm:$0xf] %v1612
      %1653 = vst [vmem:[%s388 + $0x28] sm:$0xf] %v1613
      %1654 = vst [vmem:[%s388 + $0x2c] sm:$0xf] %v1614
      %1655 = vst [vmem:[%s388 + $0x30] sm:$0xf] %v1615
      %1656 = vst [vmem:[%s388 + $0x34] sm:$0xf] %v1616
      %1657 = vst [vmem:[%s388 + $0x38] sm:$0xf] %v1617
      %1658 = vst [vmem:[%s388 + $0x3c] sm:$0xf] %v1618
      %1659 = vst [vmem:[%s388 + $0x40] sm:$0xf] %v1619
      %1660 = vst [vmem:[%s388 + $0x44] sm:$0xf] %v1620
      %1661 = vst [vmem:[%s388 + $0x48] sm:$0xf] %v1621
      %1662 = vst [vmem:[%s388 + $0x4c] sm:$0xf] %v1622
      %s1663 = smul.u32 20, %s22
      %p1664 = scmp.lt.s32.totalorder %s1663, 39
      %s1665 = scalar_select %p1664, %s1663, 39
      %s1666 = smul.addr %s1665, 4
      %s1667 = scalar_lea.vmem %s11, %s1666
      // Predicated region
      $region65: #{fourier_relu_forward.1} parent=63 // pred_check
        %p1668 = pneg %p276
      $region66: #{fourier_relu_forward.1} parent=63 // pred_check_branch
        %1670 = sbr.rel (%p1668) target = $region68
      $region67: #{fourier_relu_forward.1} parent=63 // pred_region
        %s1671 = smul.u32 20, %s22
      $region68: #{fourier_relu_forward.1} parent=63 // pred_fallthru
        _
    $region64: #{fourier_relu_forward.1} parent=5 // pred_fallthru
      _
    %p1672 = scmp.le.s32.totalorder 2, %s17
    // Predicated region
    $region69: #{fourier_relu_forward.1} parent=5 // pred_check
      %p1673 = pneg %p1672
    $region70: #{fourier_relu_forward.1} parent=5 // pred_check_branch
      %1675 = sbr.rel (%p1673) target = $region72
    $region71: #{fourier_relu_forward.1} parent=5 // pred_region
      %s1676 = ssub.s32 %s17, 2
      // Predicated region
      $region73: #{fourier_relu_forward.1} parent=71 // pred_check
        %p1677 = pneg %p282
      $region74: #{fourier_relu_forward.1} parent=71 // pred_check_branch
        %1679 = sbr.rel (%p1677) target = $region76
      $region75: #{fourier_relu_forward.1} parent=71 // pred_region
        %s1680 = smul.u32 20, %s23
        %p1681 = scmp.lt.s32.totalorder %s1680, 39
        %s1682 = scalar_select %p1681, %s1680, 39
        %s1683 = smul.addr %s1682, 4
        %s1684 = scalar_lea.vmem %s11, %s1683
      $region76: #{fourier_relu_forward.1} parent=71 // pred_fallthru
        _
    $region72: #{fourier_relu_forward.1} parent=5 // pred_fallthru
      _
  $region6: #{fourier_relu_forward.1} parent=0 // loop_footer
    %s21 = sadd.s32 1, %s17
  $region7: #{fourier_relu_forward.1} parent=0 // loop_footer_branch
    %16 = sbr.rel target = $region3
  $region8: #{fourier_relu_forward.1} parent=0 // loop_exit
    _

</llo_original>
